<compile_context>
chip_gen: v7x
topology: tpu7x:2x2x1
jax: 0.10.0
libtpu: 0.0.40
codegen_flags: <defaults>
</compile_context>

<pallas_src>
import functools

import jax
import jax.numpy as jnp
from jax.experimental import pallas as pl
from jax.experimental.pallas import tpu as pltpu


def _attention_kernel(x_ref, ctx_ref, wq_ref, wkv_ref, wo_ref, bo_ref, out_ref,
                      *, n_head, head_sz, n_q, n_ctx, scale):
    # x_ref:   (Bc*Nq, qsz)       bf16   queries of this batch chunk (rows flattened in wrapper)
    # ctx_ref: (Bc*Nc, csz)       bf16   context of this batch chunk
    # wq_ref:  (qsz, feat_sz)     bf16
    # wkv_ref: (csz, 2*feat_sz)   bf16   fused [K | V] projection
    # wo_ref:  (feat_sz, qsz)     bf16
    # bo_ref:  (1, qsz)           f32
    # out_ref: (Bc*Nq, qsz)       output dtype (f32 here)
    feat_sz = n_head * head_sz
    rows_q = x_ref.shape[0]
    bc = rows_q // n_q                     # batch elements in this chunk (static)
    cdt = wq_ref.dtype                     # MXU compute dtype (bf16)

    # --- fused, lane-dense projections: 2 MXU dispatches, f32 accumulation -------------
    q2 = jnp.dot(x_ref[...], wq_ref[...], preferred_element_type=jnp.float32)    # (Bc*Nq, F)
    kv2 = jnp.dot(ctx_ref[...], wkv_ref[...], preferred_element_type=jnp.float32)  # (Bc*Nc, 2F)
    k2 = kv2[:, :feat_sz]
    v2 = kv2[:, feat_sz:]

    # --- stack per-head lane slices onto the leading (batch) axis: index = h*Bc + b -----
    # (f32 values; reshape splits the row dim at multiples of 8, so it is tile-aligned.)
    def to_bh(t2, n):
        t3 = t2.reshape(bc, n, feat_sz)
        return jnp.concatenate(
            [t3[:, :, h * head_sz:(h + 1) * head_sz] for h in range(n_head)], axis=0)

    q_bh = to_bh(q2, n_q)      # (H*Bc, Nq, D)
    k_bh = to_bh(k2, n_ctx)    # (H*Bc, Nc, D)
    v_bh = to_bh(v2, n_ctx)    # (H*Bc, Nc, D)

    # --- scores + softmax: ONE batched dot over all (head, batch) pairs ------------------
    sim = jnp.einsum('bqd,bkd->bqk', q_bh, k_bh,
                     preferred_element_type=jnp.float32) * scale                 # (H*Bc, Nq, Nc)
    # TODO(synk): optional boolean attention mask (masked_fill before softmax) not implemented.
    sim = sim - jnp.max(sim, axis=-1, keepdims=True)
    p = jnp.exp(sim)
    attn = p * pl.reciprocal(jnp.sum(p, axis=-1, keepdims=True), approx=True)     # EUP slot
    # dropout: identity at inference time

    o_bh = jnp.einsum('bqk,bkd->bqd', attn, v_bh,
                      preferred_element_type=jnp.float32)                         # (H*Bc, Nq, D)

    # --- gather heads back onto the lane axis and fuse the output projection -------------
    o_all = jnp.concatenate(
        [o_bh[h * bc:(h + 1) * bc] for h in range(n_head)], axis=-1)              # (Bc, Nq, F)
    o2 = o_all.reshape(bc * n_q, feat_sz).astype(cdt)                             # (Bc*Nq, F)

    out = jnp.dot(o2, wo_ref[...], preferred_element_type=jnp.float32) + bo_ref[...]
    out_ref[...] = out.astype(out_ref.dtype)


def prepare_attention_params(wq, wkv, wo, bo, *, compute_dtype=jnp.bfloat16):
    """One-time parameter preprocessing — call at parameter-load time, not per forward.

    Weights are nn.Linear weights transposed to (in_features, out_features):
      wq : (query_sz, feat_sz)            to_q.weight.T
      wkv: (context_sz, 2*feat_sz)        to_kv.weight.T   ([K | V] along the output axis)
      wo : (feat_sz, query_sz)            to_out.weight.T
      bo : (query_sz,) or (1, query_sz)   to_out.bias
    """
    return (jnp.asarray(wq, compute_dtype),
            jnp.asarray(wkv, compute_dtype),
            jnp.asarray(wo, compute_dtype),
            jnp.asarray(bo, jnp.float32).reshape(1, -1))


def _default_batch_chunk(B, Nq, sublane):
    # Prefer >= 2 grid steps (DMA/compute overlap; both v7x TensorCores busy) while keeping
    # each chunk's flattened row count a multiple of the packed sublane tile.
    for c in range(max(B // 2, 1), 0, -1):
        if B % c == 0 and (c * Nq) % sublane == 0:
            return c
    return B


def attention_forward(x, context, params, *, n_head, head_sz, batch_chunk=None):
    """Pallas multi-head attention forward. Matches PyTorch Attention.forward (no mask).

    `params` comes from `prepare_attention_params`. `batch_chunk` controls how many batch
    elements one grid step processes (keep the double-buffered chunk under the per-chip VMEM
    budget — 64 MiB on v7x).
    """
    wq, wkv, wo, bo = params
    if context is None:            # self-attention
        context = x
    B, Nq, qsz = x.shape
    Bc_, Nc, csz = context.shape
    feat_sz = n_head * head_sz
    scale = float(head_sz) ** (-0.5)
    assert Bc_ == B
    assert wq.shape == (qsz, feat_sz)
    assert wkv.shape == (csz, 2 * feat_sz)
    assert wo.shape == (feat_sz, qsz)
    assert bo.shape == (1, qsz)
    # Flattened (batch, seq) rows must stay sublane-aligned inside the kernel.
    assert Nq % 8 == 0 and Nc % 8 == 0, "num_queries / num_context_points must be multiples of 8"
    # TODO(synk): pad Nq / Nc up to a multiple of 8 in the wrapper instead of asserting.

    compute_dtype = wq.dtype
    sublane = 16 if jnp.dtype(compute_dtype).itemsize == 2 else 8
    if batch_chunk is None:
        batch_chunk = _default_batch_chunk(B, Nq, sublane)
    assert B % batch_chunk == 0, "batch must be divisible by batch_chunk"
    n_chunks = B // batch_chunk

    rows_q = batch_chunk * Nq
    rows_c = batch_chunk * Nc

    # Flatten (B, N, feat) -> (B*N, feat) outside the kernel (free, row-major) so the kernel
    # never reshapes packed bf16 refs, and cast activations to the bf16 MXU dtype.
    xf = x.reshape(B * Nq, qsz).astype(compute_dtype)
    cf = context.reshape(B * Nc, csz).astype(compute_dtype)

    # Rough VMEM budget: double-buffered activation/output blocks + one copy of the weights.
    act_bytes = jnp.dtype(compute_dtype).itemsize
    est = (2 * (rows_q * qsz + rows_c * csz) * act_bytes
           + 2 * rows_q * qsz * x.dtype.itemsize
           + (wq.size + wkv.size + wo.size) * act_bytes
           + bo.size * 4)
    vmem_limit = int(min(96 * 2**20, max(16 * 2**20, 4 * est)))

    kernel = functools.partial(_attention_kernel, n_head=n_head, head_sz=head_sz,
                               n_q=Nq, n_ctx=Nc, scale=scale)

    out = pl.pallas_call(
        kernel,
        out_shape=jax.ShapeDtypeStruct((B * Nq, qsz), x.dtype),
        grid_spec=pltpu.PrefetchScalarGridSpec(
            num_scalar_prefetch=0,
            grid=(n_chunks,),
            in_specs=[
                pl.BlockSpec((rows_q, qsz), lambda b: (b, 0)),          # x rows of this chunk
                pl.BlockSpec((rows_c, csz), lambda b: (b, 0)),          # context rows
                pl.BlockSpec((qsz, feat_sz), lambda b: (0, 0)),         # W_q   (full, loaded once)
                pl.BlockSpec((csz, 2 * feat_sz), lambda b: (0, 0)),     # W_kv  (lane-dense N=2F)
                pl.BlockSpec((feat_sz, qsz), lambda b: (0, 0)),         # W_out
                pl.BlockSpec((1, qsz), lambda b: (0, 0)),               # b_out
            ],
            out_specs=pl.BlockSpec((rows_q, qsz), lambda b: (b, 0)),    # un-padded output block
        ),
        compiler_params=pltpu.CompilerParams(
            dimension_semantics=("parallel",),
            vmem_limit_bytes=vmem_limit),
    )(xf, cf, wq, wkv, wo, bo)

    return out.reshape(B, Nq, qsz)


def attention_reference(x, context, wq, wkv, wo, bo, *, n_head, head_sz):
    """Pure-JAX f32 reference mirroring the PyTorch forward (for verification)."""
    feat_sz = n_head * head_sz
    scale = float(head_sz) ** (-0.5)
    B, Nq, _ = x.shape
    if context is None:
        context = x
    Nc = context.shape[1]

    q = x @ wq
    kv = context @ wkv
    k, v = kv[..., :feat_sz], kv[..., feat_sz:]

    def split_heads(t, n):
        return t.reshape(B, n, n_head, head_sz).transpose(0, 2, 1, 3)  # (B,H,n,D)

    qh, kh, vh = split_heads(q, Nq), split_heads(k, Nc), split_heads(v, Nc)
    sim = jnp.einsum('bhid,bhjd->bhij', qh, kh) * scale
    attn = jax.nn.softmax(sim, axis=-1)
    o = jnp.einsum('bhij,bhjd->bhid', attn, vh)
    o = o.transpose(0, 2, 1, 3).reshape(B, Nq, feat_sz)
    return o @ wo + bo.reshape(1, -1)


if __name__ == "__main__":
    # Config consistent with the module's __init__ (cross-attention).
    B = 4          # batch
    Nq = 8         # num_queries
    Nc = 8         # num_context_points
    query_sz = 32
    context_sz = 32
    head_sz = 16
    n_head = 4
    feat_sz = head_sz * n_head

    key = jax.random.PRNGKey(0)
    k_x, k_c, k_q, k_kv, k_o, k_b = jax.random.split(key, 6)

    x = jax.random.normal(k_x, (B, Nq, query_sz), dtype=jnp.float32)
    context = jax.random.normal(k_c, (B, Nc, context_sz), dtype=jnp.float32)

    # Deterministic parameter init (stored as (in_features, out_features)).
    wq = 0.05 * jax.random.normal(k_q, (query_sz, feat_sz), dtype=jnp.float32)
    wkv = 0.05 * jax.random.normal(k_kv, (context_sz, 2 * feat_sz), dtype=jnp.float32)
    wo = 0.05 * jax.random.normal(k_o, (feat_sz, query_sz), dtype=jnp.float32)
    bo = 0.05 * jax.random.normal(k_b, (query_sz,), dtype=jnp.float32)

    # One-time parameter preprocessing (bf16 cast) — hoisted out of the forward path.
    params = prepare_attention_params(wq, wkv, wo, bo)

    out = attention_forward(x, context, params, n_head=n_head, head_sz=head_sz)
    out = jax.block_until_ready(out)

    ref = attention_reference(x, context, wq, wkv, wo, bo, n_head=n_head, head_sz=head_sz)
    assert out.shape == (B, Nq, query_sz)
    # Tolerance accounts for bf16 MXU operands and the approximate EUP reciprocal in softmax.
    err = float(jnp.max(jnp.abs(out - ref)))
    assert err < 2e-2, f"mismatch vs pure-JAX reference: max abs err {err}"

    print("KERNEL_OK")
</pallas_src>

<mosaic_0001>
module attributes {stable_mosaic.version = 11 : i64} {
  func.func @_attention_kernel(%arg0: i32, %arg1: memref<16x32xbf16, #tpu.memory_space<vmem>>, %arg2: memref<16x32xbf16, #tpu.memory_space<vmem>>, %arg3: memref<32x64xbf16, #tpu.memory_space<vmem>>, %arg4: memref<32x128xbf16, #tpu.memory_space<vmem>>, %arg5: memref<64x32xbf16, #tpu.memory_space<vmem>>, %arg6: memref<1x32xf32, #tpu.memory_space<vmem>>, %arg7: memref<16x32xf32, #tpu.memory_space<vmem>>) attributes {dimension_semantics = [#tpu.dimension_semantics<parallel>], iteration_bounds = array<i64: 2>, scalar_prefetch = 0 : i64, scratch_operands = 0 : i64, tpu.core_type = #tpu.core_type<tc>, window_params = [{transform_indices = @transform_0, window_bounds = array<i64: 16, 32>}, {transform_indices = @transform_1, window_bounds = array<i64: 16, 32>}, {pipeline_mode = #tpu.pipeline_mode<synchronous>, transform_indices = @transform_2, window_bounds = array<i64: 32, 64>}, {pipeline_mode = #tpu.pipeline_mode<synchronous>, transform_indices = @transform_3, window_bounds = array<i64: 32, 128>}, {pipeline_mode = #tpu.pipeline_mode<synchronous>, transform_indices = @transform_4, window_bounds = array<i64: 64, 32>}, {pipeline_mode = #tpu.pipeline_mode<synchronous>, transform_indices = @transform_5, window_bounds = array<i64: 1, 32>}, {transform_indices = @transform_6, window_bounds = array<i64: 16, 32>}]} {
    %c0 = arith.constant 0 : index
    %c0_0 = arith.constant 0 : index
    %0 = vector.load %arg1[%c0, %c0_0] : memref<16x32xbf16, #tpu.memory_space<vmem>>, vector<16x32xbf16>
    %c0_1 = arith.constant 0 : index
    %c0_2 = arith.constant 0 : index
    %1 = vector.load %arg3[%c0_1, %c0_2] : memref<32x64xbf16, #tpu.memory_space<vmem>>, vector<32x64xbf16>
    %cst = arith.constant dense<0.000000e+00> : vector<16x64xf32>
    %2 = tpu.matmul %0, %1, %cst {dimension_numbers = #tpu.dot_dimension_numbers<[1], [0], [0], [1], [0, 0, 1, 1], [], []>} : vector<16x32xbf16>, vector<32x64xbf16>, vector<16x64xf32> -> vector<16x64xf32>
    %c0_3 = arith.constant 0 : index
    %c0_4 = arith.constant 0 : index
    %3 = vector.load %arg2[%c0_3, %c0_4] : memref<16x32xbf16, #tpu.memory_space<vmem>>, vector<16x32xbf16>
    %c0_5 = arith.constant 0 : index
    %c0_6 = arith.constant 0 : index
    %4 = vector.load %arg4[%c0_5, %c0_6] : memref<32x128xbf16, #tpu.memory_space<vmem>>, vector<32x128xbf16>
    %cst_7 = arith.constant dense<0.000000e+00> : vector<16x128xf32>
    %5 = tpu.matmul %3, %4, %cst_7 {dimension_numbers = #tpu.dot_dimension_numbers<[1], [0], [0], [1], [0, 0, 1, 1], [], []>} : vector<16x32xbf16>, vector<32x128xbf16>, vector<16x128xf32> -> vector<16x128xf32>
    %6 = vector.extract_strided_slice %5 {offsets = [0, 0], sizes = [16, 64], strides = [1, 1]} : vector<16x128xf32> to vector<16x64xf32>
    %7 = vector.extract_strided_slice %5 {offsets = [0, 64], sizes = [16, 64], strides = [1, 1]} : vector<16x128xf32> to vector<16x64xf32>
    %8 = vector.shape_cast %2 : vector<16x64xf32> to vector<2x8x64xf32>
    %9 = vector.extract_strided_slice %8 {offsets = [0, 0, 0], sizes = [2, 8, 16], strides = [1, 1, 1]} : vector<2x8x64xf32> to vector<2x8x16xf32>
    %10 = vector.extract_strided_slice %8 {offsets = [0, 0, 16], sizes = [2, 8, 16], strides = [1, 1, 1]} : vector<2x8x64xf32> to vector<2x8x16xf32>
    %11 = vector.extract_strided_slice %8 {offsets = [0, 0, 32], sizes = [2, 8, 16], strides = [1, 1, 1]} : vector<2x8x64xf32> to vector<2x8x16xf32>
    %12 = vector.extract_strided_slice %8 {offsets = [0, 0, 48], sizes = [2, 8, 16], strides = [1, 1, 1]} : vector<2x8x64xf32> to vector<2x8x16xf32>
    %13 = tpu.concatenate %9, %10, %11, %12 in 0 : vector<2x8x16xf32>, vector<2x8x16xf32>, vector<2x8x16xf32>, vector<2x8x16xf32> -> vector<8x8x16xf32>
    %14 = vector.shape_cast %6 : vector<16x64xf32> to vector<2x8x64xf32>
    %15 = vector.extract_strided_slice %14 {offsets = [0, 0, 0], sizes = [2, 8, 16], strides = [1, 1, 1]} : vector<2x8x64xf32> to vector<2x8x16xf32>
    %16 = vector.extract_strided_slice %14 {offsets = [0, 0, 16], sizes = [2, 8, 16], strides = [1, 1, 1]} : vector<2x8x64xf32> to vector<2x8x16xf32>
    %17 = vector.extract_strided_slice %14 {offsets = [0, 0, 32], sizes = [2, 8, 16], strides = [1, 1, 1]} : vector<2x8x64xf32> to vector<2x8x16xf32>
    %18 = vector.extract_strided_slice %14 {offsets = [0, 0, 48], sizes = [2, 8, 16], strides = [1, 1, 1]} : vector<2x8x64xf32> to vector<2x8x16xf32>
    %19 = tpu.concatenate %15, %16, %17, %18 in 0 : vector<2x8x16xf32>, vector<2x8x16xf32>, vector<2x8x16xf32>, vector<2x8x16xf32> -> vector<8x8x16xf32>
    %20 = vector.shape_cast %7 : vector<16x64xf32> to vector<2x8x64xf32>
    %21 = vector.extract_strided_slice %20 {offsets = [0, 0, 0], sizes = [2, 8, 16], strides = [1, 1, 1]} : vector<2x8x64xf32> to vector<2x8x16xf32>
    %22 = vector.extract_strided_slice %20 {offsets = [0, 0, 16], sizes = [2, 8, 16], strides = [1, 1, 1]} : vector<2x8x64xf32> to vector<2x8x16xf32>
    %23 = vector.extract_strided_slice %20 {offsets = [0, 0, 32], sizes = [2, 8, 16], strides = [1, 1, 1]} : vector<2x8x64xf32> to vector<2x8x16xf32>
    %24 = vector.extract_strided_slice %20 {offsets = [0, 0, 48], sizes = [2, 8, 16], strides = [1, 1, 1]} : vector<2x8x64xf32> to vector<2x8x16xf32>
    %25 = tpu.concatenate %21, %22, %23, %24 in 0 : vector<2x8x16xf32>, vector<2x8x16xf32>, vector<2x8x16xf32>, vector<2x8x16xf32> -> vector<8x8x16xf32>
    "tpu.trace_start"() <{level = 10 : i32, message = "bqd,bkd->bqk"}> : () -> ()
    %cst_8 = arith.constant dense<0.000000e+00> : vector<8x8x8xf32>
    %26 = tpu.matmul %13, %19, %cst_8 {dimension_numbers = #tpu.dot_dimension_numbers<[2], [2], [1], [1], [0, 0, 0, 1, 1, 1], [0], [0]>} : vector<8x8x16xf32>, vector<8x8x16xf32>, vector<8x8x8xf32> -> vector<8x8x8xf32>
    "tpu.trace_stop"() : () -> ()
    %cst_9 = arith.constant 2.500000e-01 : f32
    %27 = vector.broadcast %cst_9 : f32 to vector<8x8x8xf32>
    %28 = arith.mulf %26, %27 : vector<8x8x8xf32>
    %cst_10 = arith.constant dense<0xFF800000> : vector<8x8xf32>
    %29 = vector.multi_reduction <maximumf>, %28, %cst_10 [2] : vector<8x8x8xf32> to vector<8x8xf32>
    %30 = vector.shape_cast %29 : vector<8x8xf32> to vector<8x8x1xf32>
    %31 = vector.broadcast %30 : vector<8x8x1xf32> to vector<8x8x8xf32>
    %32 = arith.subf %28, %31 : vector<8x8x8xf32>
    %33 = math.exp %32 : vector<8x8x8xf32>
    %cst_11 = arith.constant dense<0.000000e+00> : vector<8x8xf32>
    %34 = vector.multi_reduction <add>, %33, %cst_11 [2] : vector<8x8x8xf32> to vector<8x8xf32>
    %35 = vector.shape_cast %34 : vector<8x8xf32> to vector<8x8x1xf32>
    %36 = tpu.reciprocal %35 {approx = true} : vector<8x8x1xf32> -> vector<8x8x1xf32>
    %37 = vector.broadcast %36 : vector<8x8x1xf32> to vector<8x8x8xf32>
    %38 = arith.mulf %33, %37 : vector<8x8x8xf32>
    "tpu.trace_start"() <{level = 10 : i32, message = "bqk,bkd->bqd"}> : () -> ()
    %cst_12 = arith.constant dense<0.000000e+00> : vector<8x8x16xf32>
    %39 = tpu.matmul %38, %25, %cst_12 {dimension_numbers = #tpu.dot_dimension_numbers<[2], [1], [1], [2], [0, 0, 0, 1, 1, 2], [0], [0]>} : vector<8x8x8xf32>, vector<8x8x16xf32>, vector<8x8x16xf32> -> vector<8x8x16xf32>
    "tpu.trace_stop"() : () -> ()
    %40 = vector.extract_strided_slice %39 {offsets = [0, 0, 0], sizes = [2, 8, 16], strides = [1, 1, 1]} : vector<8x8x16xf32> to vector<2x8x16xf32>
    %41 = vector.extract_strided_slice %39 {offsets = [2, 0, 0], sizes = [2, 8, 16], strides = [1, 1, 1]} : vector<8x8x16xf32> to vector<2x8x16xf32>
    %42 = vector.extract_strided_slice %39 {offsets = [4, 0, 0], sizes = [2, 8, 16], strides = [1, 1, 1]} : vector<8x8x16xf32> to vector<2x8x16xf32>
    %43 = vector.extract_strided_slice %39 {offsets = [6, 0, 0], sizes = [2, 8, 16], strides = [1, 1, 1]} : vector<8x8x16xf32> to vector<2x8x16xf32>
    %44 = tpu.concatenate %40, %41, %42, %43 in 2 : vector<2x8x16xf32>, vector<2x8x16xf32>, vector<2x8x16xf32>, vector<2x8x16xf32> -> vector<2x8x64xf32>
    %45 = vector.shape_cast %44 : vector<2x8x64xf32> to vector<16x64xf32>
    %46 = arith.truncf %45 : vector<16x64xf32> to vector<16x64xbf16>
    %c0_13 = arith.constant 0 : index
    %c0_14 = arith.constant 0 : index
    %47 = vector.load %arg5[%c0_13, %c0_14] : memref<64x32xbf16, #tpu.memory_space<vmem>>, vector<64x32xbf16>
    %cst_15 = arith.constant dense<0.000000e+00> : vector<16x32xf32>
    %48 = tpu.matmul %46, %47, %cst_15 {dimension_numbers = #tpu.dot_dimension_numbers<[1], [0], [0], [1], [0, 0, 1, 1], [], []>} : vector<16x64xbf16>, vector<64x32xbf16>, vector<16x32xf32> -> vector<16x32xf32>
    %c0_16 = arith.constant 0 : index
    %c0_17 = arith.constant 0 : index
    %49 = vector.load %arg6[%c0_16, %c0_17] : memref<1x32xf32, #tpu.memory_space<vmem>>, vector<1x32xf32>
    %50 = vector.broadcast %49 : vector<1x32xf32> to vector<16x32xf32>
    %51 = arith.addf %48, %50 : vector<16x32xf32>
    %c0_18 = arith.constant 0 : index
    %c0_19 = arith.constant 0 : index
    %52 = vector.load %arg7[%c0_18, %c0_19] : memref<16x32xf32, #tpu.memory_space<vmem>>, vector<16x32xf32>
    tpu.vector_store %arg7[%c0_18, %c0_19], %51 {strides = array<i32>} : memref<16x32xf32, #tpu.memory_space<vmem>>, vector<16x32xf32>,
    return
  }
  func.func @transform_0(%arg0: i32) -> (i32, i32) {
    %c0_i32 = arith.constant 0 : i32
    %c0_i32_0 = arith.constant 0 : i32
    return %arg0, %c0_i32 : i32, i32
  }
  func.func @transform_1(%arg0: i32) -> (i32, i32) {
    %c0_i32 = arith.constant 0 : i32
    %c0_i32_0 = arith.constant 0 : i32
    return %arg0, %c0_i32 : i32, i32
  }
  func.func @transform_2(%arg0: i32) -> (i32, i32) {
    %c0_i32 = arith.constant 0 : i32
    %c0_i32_0 = arith.constant 0 : i32
    %c0_i32_1 = arith.constant 0 : i32
    return %c0_i32, %c0_i32_0 : i32, i32
  }
  func.func @transform_3(%arg0: i32) -> (i32, i32) {
    %c0_i32 = arith.constant 0 : i32
    %c0_i32_0 = arith.constant 0 : i32
    %c0_i32_1 = arith.constant 0 : i32
    return %c0_i32, %c0_i32_0 : i32, i32
  }
  func.func @transform_4(%arg0: i32) -> (i32, i32) {
    %c0_i32 = arith.constant 0 : i32
    %c0_i32_0 = arith.constant 0 : i32
    %c0_i32_1 = arith.constant 0 : i32
    return %c0_i32, %c0_i32_0 : i32, i32
  }
  func.func @transform_5(%arg0: i32) -> (i32, i32) {
    %c0_i32 = arith.constant 0 : i32
    %c0_i32_0 = arith.constant 0 : i32
    %c0_i32_1 = arith.constant 0 : i32
    return %c0_i32, %c0_i32_0 : i32, i32
  }
  func.func @transform_6(%arg0: i32) -> (i32, i32) {
    %c0_i32 = arith.constant 0 : i32
    %c0_i32_0 = arith.constant 0 : i32
    return %arg0, %c0_i32 : i32, i32
  }
}

</mosaic_0001>

<llo_original>
// kernel: tpu_custom_call.1
$region0: #{tpu_custom_call.1}
  #allocation0 [shape = 'u32[]', space=smem, size = 0x4, offset = 0x4, fixed_abs, tag = 'smem constant byte address 0x4 - core index']
  #allocation1 [shape = 'u32[144,128]{1,0:T(1,128)}', space=vmem, size = 0x12000, scoped, tag = 'internal scratch']
  %s0 = inlined_call_operand.vmem [shape: bf16[32,32], index: 0, kind: input, shape index: {}]
  %s1 = inlined_call_operand.vmem [shape: bf16[32,32], index: 1, kind: input, shape index: {}]
  %s2 = inlined_call_operand.vmem [shape: bf16[32,64], index: 2, kind: input, shape index: {}]
  %s3 = inlined_call_operand.hbm [shape: bf16[32,128], index: 3, kind: input, shape index: {}]
  %s4 = inlined_call_operand.vmem [shape: bf16[64,32], index: 4, kind: input, shape index: {}]
  %s5 = inlined_call_operand.vmem [shape: f32[1,32], index: 5, kind: input, shape index: {}]
  %s6 = inlined_call_operand.hbm [shape: f32[32,32], index: 6, kind: output, shape index: {}]
  %s7 = sld [smem:[#allocation0]]
  $region61: #{tpu_custom_call.1} parent=0
    _
  %s9 = ssub.s32 1, %s7
  %s10 = scalar_select 0, %s9, %s7
  $region1: #{tpu_custom_call.1} parent=0
    #allocation2 [shape = 'u8[8192]{0}', space=vmem, size = 0x2000, scoped, tag = 'input window, operand 3, single buffered']
    #allocation3 [shape = 's32[2]{0}', space=sflag, size = 0x8, scoped, tag = 'scoped memory for tpu_custom_call.1']
    #allocation4 [shape = 's32[2]{0}', space=sflag, size = 0x8, scoped, tag = 'scoped memory for tpu_custom_call.1']
    #allocation5 [shape = 'u8[16384]{0}', space=vmem, size = 0x4000, scoped, tag = 'output window, operand 0']
    %11 = vsyncpa [#allocation3], 0
    %12 = vsyncpa [#allocation4], 0
    %s13 = scalar_lea.sflag [#allocation4], 1
    %14 = vsyncpa %s13, 0
    loop: start=0, step=1, limit=4
    $region2: #{tpu_custom_call.1} parent=1 // loop_pre_header
      _
    $region3: #{tpu_custom_call.1} parent=1 // loop_header
      %s16 = sphi 0, %s20
      %p17 = scmp.ge.s32.totalorder %s16, 4
      %s26 = sphi 0, %s28
      %s29 = sphi 0, %s26
      %s30 = sphi 0, %s29
      %s46 = sphi 0, %s30
      %s52 = sphi 0, %s54
      %s55 = sphi 0, %s52
      %s56 = sphi 0, %s55
      %s72 = sphi 0, %s56
      %s76 = sphi 0, %s76
      %s78 = sphi 0, %s76
      %s79 = sphi 0, %s78
      %s93 = sphi 0, %s79
      %s97 = sphi 0, %s97
      %s99 = sphi 0, %s97
      %s100 = sphi 0, %s99
      %s114 = sphi 0, %s100
      %s118 = sphi 0, %s118
      %s120 = sphi 0, %s118
      %s121 = sphi 0, %s120
      %s135 = sphi 0, %s121
      %s139 = sphi 0, %s139
      %s141 = sphi 0, %s139
      %s142 = sphi 0, %s141
      %s156 = sphi 0, %s142
      %s162 = sphi 0, %s164
      %s165 = sphi 0, %s162
      %s166 = sphi 0, %s165
      %s182 = sphi 0, %s166
    $region4: #{tpu_custom_call.1} parent=1 // loop_header_branch
      %19 = sbr.rel (%p17) target = $region8
    $region5: #{tpu_custom_call.1} parent=1 // loop_body
      %s21 = ssub.s32 %s16, 1
      %s22 = ssub.s32 %s16, 2
      %s23 = sadd.s32 %s16, 1
      %s24 = ssub.s32 %s16, %s23
      %p25 = scmp.eq.s32.totalorder %s24, 0
      %s27 = sadd.s32 %s26, 1
      %s28 = scalar_select %p25, %s26, %s27
      %p31 = pneg %p25
      %p32 = scmp.eq.s32.totalorder %s16, 1
      %p33 = por %p31, %p32
      %p34 = scmp.ne.s32.totalorder %s26, %s29
      %p35 = scmp.eq.s32.totalorder %s16, 0
      %p36 = por %p34, %p35
      %p37 = scmp.ne.s32.totalorder %s26, %s29
      %p38 = scmp.eq.s32.totalorder %s21, 1
      %p39 = por %p37, %p38
      %p40 = scmp.ne.s32.totalorder %s29, %s30
      %p41 = scmp.eq.s32.totalorder %s21, 0
      %p42 = por %p40, %p41
      %p43 = scmp.ne.s32.totalorder %s29, %s30
      %p44 = scmp.eq.s32.totalorder %s22, 1
      %p45 = por %p43, %p44
      %p47 = scmp.ne.s32.totalorder %s30, %s46
      %p48 = scmp.eq.s32.totalorder %s22, 0
      %p49 = por %p47, %p48
      %s50 = ssub.s32 %s16, %s23
      %p51 = scmp.eq.s32.totalorder %s50, 0
      %s53 = sadd.s32 %s52, 1
      %s54 = scalar_select %p51, %s52, %s53
      %p57 = pneg %p51
      %p58 = scmp.eq.s32.totalorder %s16, 1
      %p59 = por %p57, %p58
      %p60 = scmp.ne.s32.totalorder %s52, %s55
      %p61 = scmp.eq.s32.totalorder %s16, 0
      %p62 = por %p60, %p61
      %p63 = scmp.ne.s32.totalorder %s52, %s55
      %p64 = scmp.eq.s32.totalorder %s21, 1
      %p65 = por %p63, %p64
      %p66 = scmp.ne.s32.totalorder %s55, %s56
      %p67 = scmp.eq.s32.totalorder %s21, 0
      %p68 = por %p66, %p67
      %p69 = scmp.ne.s32.totalorder %s55, %s56
      %p70 = scmp.eq.s32.totalorder %s22, 1
      %p71 = por %p69, %p70
      %p73 = scmp.ne.s32.totalorder %s56, %s72
      %p74 = scmp.eq.s32.totalorder %s22, 0
      %p75 = por %p73, %p74
      %s77 = sadd.s32 %s76, 1
      %p80 = scmp.eq.s32.totalorder %s16, 1
      %p81 = scmp.ne.s32.totalorder %s76, %s78
      %p82 = scmp.eq.s32.totalorder %s16, 0
      %p83 = por %p81, %p82
      %p84 = scmp.ne.s32.totalorder %s76, %s78
      %p85 = scmp.eq.s32.totalorder %s21, 1
      %p86 = por %p84, %p85
      %p87 = scmp.ne.s32.totalorder %s78, %s79
      %p88 = scmp.eq.s32.totalorder %s21, 0
      %p89 = por %p87, %p88
      %p90 = scmp.ne.s32.totalorder %s78, %s79
      %p91 = scmp.eq.s32.totalorder %s22, 1
      %p92 = por %p90, %p91
      %p94 = scmp.ne.s32.totalorder %s79, %s93
      %p95 = scmp.eq.s32.totalorder %s22, 0
      %p96 = por %p94, %p95
      %s98 = sadd.s32 %s97, 1
      %p101 = scmp.eq.s32.totalorder %s16, 1
      %p102 = scmp.ne.s32.totalorder %s97, %s99
      %p103 = scmp.eq.s32.totalorder %s16, 0
      %p104 = por %p102, %p103
      %p105 = scmp.ne.s32.totalorder %s97, %s99
      %p106 = scmp.eq.s32.totalorder %s21, 1
      %p107 = por %p105, %p106
      %p108 = scmp.ne.s32.totalorder %s99, %s100
      %p109 = scmp.eq.s32.totalorder %s21, 0
      %p110 = por %p108, %p109
      %p111 = scmp.ne.s32.totalorder %s99, %s100
      %p112 = scmp.eq.s32.totalorder %s22, 1
      %p113 = por %p111, %p112
      %p115 = scmp.ne.s32.totalorder %s100, %s114
      %p116 = scmp.eq.s32.totalorder %s22, 0
      %p117 = por %p115, %p116
      %s119 = sadd.s32 %s118, 1
      %p122 = scmp.eq.s32.totalorder %s16, 1
      %p123 = scmp.ne.s32.totalorder %s118, %s120
      %p124 = scmp.eq.s32.totalorder %s16, 0
      %p125 = por %p123, %p124
      %p126 = scmp.ne.s32.totalorder %s118, %s120
      %p127 = scmp.eq.s32.totalorder %s21, 1
      %p128 = por %p126, %p127
      %p129 = scmp.ne.s32.totalorder %s120, %s121
      %p130 = scmp.eq.s32.totalorder %s21, 0
      %p131 = por %p129, %p130
      %p132 = scmp.ne.s32.totalorder %s120, %s121
      %p133 = scmp.eq.s32.totalorder %s22, 1
      %p134 = por %p132, %p133
      %p136 = scmp.ne.s32.totalorder %s121, %s135
      %p137 = scmp.eq.s32.totalorder %s22, 0
      %p138 = por %p136, %p137
      %s140 = sadd.s32 %s139, 1
      %p143 = scmp.eq.s32.totalorder %s16, 1
      %p144 = scmp.ne.s32.totalorder %s139, %s141
      %p145 = scmp.eq.s32.totalorder %s16, 0
      %p146 = por %p144, %p145
      %p147 = scmp.ne.s32.totalorder %s139, %s141
      %p148 = scmp.eq.s32.totalorder %s21, 1
      %p149 = por %p147, %p148
      %p150 = scmp.ne.s32.totalorder %s141, %s142
      %p151 = scmp.eq.s32.totalorder %s21, 0
      %p152 = por %p150, %p151
      %p153 = scmp.ne.s32.totalorder %s141, %s142
      %p154 = scmp.eq.s32.totalorder %s22, 1
      %p155 = por %p153, %p154
      %p157 = scmp.ne.s32.totalorder %s142, %s156
      %p158 = scmp.eq.s32.totalorder %s22, 0
      %p159 = por %p157, %p158
      %s160 = ssub.s32 %s16, %s23
      %p161 = scmp.eq.s32.totalorder %s160, 0
      %s163 = sadd.s32 %s162, 1
      %s164 = scalar_select %p161, %s162, %s163
      %p167 = pneg %p161
      %p168 = scmp.eq.s32.totalorder %s16, 1
      %p169 = por %p167, %p168
      %p170 = scmp.ne.s32.totalorder %s162, %s165
      %p171 = scmp.eq.s32.totalorder %s16, 0
      %p172 = por %p170, %p171
      %p173 = scmp.ne.s32.totalorder %s162, %s165
      %p174 = scmp.eq.s32.totalorder %s21, 1
      %p175 = por %p173, %p174
      %p176 = scmp.ne.s32.totalorder %s165, %s166
      %p177 = scmp.eq.s32.totalorder %s21, 0
      %p178 = por %p176, %p177
      %p179 = scmp.ne.s32.totalorder %s165, %s166
      %p180 = scmp.eq.s32.totalorder %s22, 1
      %p181 = por %p179, %p180
      %p183 = scmp.ne.s32.totalorder %s166, %s182
      %p184 = scmp.eq.s32.totalorder %s22, 0
      %p185 = por %p183, %p184
      %p186 = scmp.le.s32.totalorder 1, %s16
      %p187 = scmp.lt.s32.totalorder %s16, 3
      %p188 = pnand %p186, %p187
      %p189 = pneg %p188
      // Predicated region
      $region9: #{tpu_custom_call.1} parent=5 // pred_check
        _
      $region10: #{tpu_custom_call.1} parent=5 // pred_check_branch
        %191 = sbr.rel (%p188) target = $region12
      $region11: #{tpu_custom_call.1} parent=5 // pred_region
        %s192 = ssub.s32 %s16, 1
        // Predicated region
        $region13: #{tpu_custom_call.1} parent=11 // pred_check
          %p193 = pneg %p89
        $region14: #{tpu_custom_call.1} parent=11 // pred_check_branch
          %195 = sbr.rel (%p193) target = $region16
        $region15: #{tpu_custom_call.1} parent=11 // pred_region
          _
        $region16: #{tpu_custom_call.1} parent=11 // pred_fallthru
          _
        // Predicated region
        $region17: #{tpu_custom_call.1} parent=11 // pred_check
          %p196 = pneg %p110
        $region18: #{tpu_custom_call.1} parent=11 // pred_check_branch
          %198 = sbr.rel (%p196) target = $region20
        $region19: #{tpu_custom_call.1} parent=11 // pred_region
          %s200 = ssub.s32 256, 256
          %201 = vsyncadd [#allocation3], %s200
          %s202 = sshll.u32 [#allocation2], 4
          %s203 = int_to_ptr.vmem [resolvable:$true] %s202
          %208 = dma.hbm_to_vmem [thread:$0]  %s3, 256, %s203, [#allocation3], 64, 64, 4
        $region20: #{tpu_custom_call.1} parent=11 // pred_fallthru
          _
        // Predicated region
        $region21: #{tpu_custom_call.1} parent=11 // pred_check
          %p209 = pneg %p131
        $region22: #{tpu_custom_call.1} parent=11 // pred_check_branch
          %211 = sbr.rel (%p209) target = $region24
        $region23: #{tpu_custom_call.1} parent=11 // pred_region
          _
        $region24: #{tpu_custom_call.1} parent=11 // pred_fallthru
          _
        // Predicated region
        $region25: #{tpu_custom_call.1} parent=11 // pred_check
          %p212 = pneg %p152
        $region26: #{tpu_custom_call.1} parent=11 // pred_check_branch
          %214 = sbr.rel (%p212) target = $region28
        $region27: #{tpu_custom_call.1} parent=11 // pred_region
          _
        $region28: #{tpu_custom_call.1} parent=11 // pred_fallthru
          _
      $region12: #{tpu_custom_call.1} parent=5 // pred_fallthru
        _
      %p215 = scmp.lt.s32.totalorder %s16, 2
      // Predicated region
      $region29: #{tpu_custom_call.1} parent=5 // pred_check
        %p216 = pneg %p215
      $region30: #{tpu_custom_call.1} parent=5 // pred_check_branch
        %218 = sbr.rel (%p216) target = $region32
      $region31: #{tpu_custom_call.1} parent=5 // pred_region
        // Predicated region
        $region33: #{tpu_custom_call.1} parent=31 // pred_check
          %p219 = pneg %p36
        $region34: #{tpu_custom_call.1} parent=31 // pred_check_branch
          %221 = sbr.rel (%p219) target = $region36
        $region35: #{tpu_custom_call.1} parent=31 // pred_region
          %s222 = smul.u32 2, %s16
          %p223 = scmp.lt.s32.totalorder %s222, 3
          %s224 = scalar_select %p223, %s222, 3
          %s225 = smul.addr %s224, 4
          %s226 = scalar_lea.vmem %s0, %s225
          %s227 = smul.u32 2, %s16
        $region36: #{tpu_custom_call.1} parent=31 // pred_fallthru
          _
        // Predicated region
        $region37: #{tpu_custom_call.1} parent=31 // pred_check
          %p228 = pneg %p62
        $region38: #{tpu_custom_call.1} parent=31 // pred_check_branch
          %230 = sbr.rel (%p228) target = $region40
        $region39: #{tpu_custom_call.1} parent=31 // pred_region
          %s231 = smul.u32 2, %s16
          %p232 = scmp.lt.s32.totalorder %s231, 3
          %s233 = scalar_select %p232, %s231, 3
          %s234 = smul.addr %s233, 4
          %s235 = scalar_lea.vmem %s1, %s234
          %s236 = smul.u32 2, %s16
        $region40: #{tpu_custom_call.1} parent=31 // pred_fallthru
          _
      $region32: #{tpu_custom_call.1} parent=5 // pred_fallthru
        _
      %p237 = scmp.le.s32.totalorder 1, %s16
      %p238 = scmp.lt.s32.totalorder %s16, 3
      %p239 = pnand %p237, %p238
      %p240 = pneg %p239
      // Predicated region
      $region41: #{tpu_custom_call.1} parent=5 // pred_check
        _
      $region42: #{tpu_custom_call.1} parent=5 // pred_check_branch
        %242 = sbr.rel (%p239) target = $region44
      $region43: #{tpu_custom_call.1} parent=5 // pred_region
        %s243 = ssub.s32 %s16, 1
        // Predicated region
        $region45: #{tpu_custom_call.1} parent=43 // pred_check
          %p244 = pneg %p110
        $region46: #{tpu_custom_call.1} parent=43 // pred_check_branch
          %246 = sbr.rel (%p244) target = $region48
        $region47: #{tpu_custom_call.1} parent=43 // pred_region
          %247 = dma.done [#allocation3], 256
        $region48: #{tpu_custom_call.1} parent=43 // pred_fallthru
          _
        %s248 = smul.u32 2, %s21
        %p249 = scmp.lt.s32.totalorder %s248, 3
        %s250 = scalar_select %p249, %s248, 3
        %s251 = smul.addr %s250, 4
        %s252 = scalar_lea.vmem %s0, %s251
        %p253 = pneg %p42
        %p254 = pneg %p39
        %s255 = smul.u32 2, %s21
        %p256 = scmp.lt.s32.totalorder %s255, 3
        %s257 = scalar_select %p256, %s255, 3
        %s258 = smul.addr %s257, 4
        %s259 = scalar_lea.vmem %s1, %s258
        %p260 = pneg %p68
        %p261 = pneg %p65
        %p262 = pneg %p89
        %p263 = pneg %p86
        %p264 = pneg %p110
        %p265 = pneg %p107
        %p266 = pneg %p131
        %p267 = pneg %p128
        %p268 = pneg %p152
        %p269 = pneg %p149
        %p270 = pneg %p178
        %p271 = pneg %p175
        %s272 = sand.u32 %s165, 1
        %s273 = scalar_lea.sflag [#allocation4], %s272
        %s274 = sand.u32 %s165, 1
        %s275 = smul.addr %s274, 16
        %s276 = scalar_lea.vmem [#allocation5], %s275
        %s277 = smul.u32 2, %s21
        %p278 = scmp.lt.s32.totalorder %s277, 3
        %s279 = scalar_select %p278, %s277, 3
        %s280 = smul.addr %s279, 4
        %s281 = scalar_lea.vmem %s0, %s280
        %s282 = smul.u32 2, %s21
        %s283 = smul.u32 2, %s21
        %p284 = scmp.lt.s32.totalorder %s283, 3
        %s285 = scalar_select %p284, %s283, 3
        %s286 = smul.addr %s285, 4
        %s287 = scalar_lea.vmem %s1, %s286
        %s288 = smul.u32 2, %s21
        %s289 = smul.u32 2, %s21
        %v291 = vld [vmem:[%s281] sm:$0xf]
        %v292 = vld [vmem:[%s281 + $0x4] sm:$0xf]
        %v293 = vld [vmem:[%s2] sm:$0xf]
        %v294 = vld [vmem:[%s2 + $0x4] sm:$0xf]
        %v295 = vld [vmem:[%s2 + $0x8] sm:$0xf]
        %v296 = vld [vmem:[%s2 + $0xc] sm:$0xf]
        %v299 = vunpack.c.l.b16 %v291
        %v300 = vunpack.c.l.b16 %v292
        %v301 = vpack.c.b16 %v300, %v299
        %v306 = vunpack.c.l.b16 %v293
        %v307 = vunpack.c.l.b16 %v294
        %v308 = vunpack.c.l.b16 %v295
        %v309 = vunpack.c.l.b16 %v296
        %v310 = vpack.c.b16 %v307, %v306
        %v311 = vpack.c.b16 %v309, %v308
        %vm314 = vcmask 261120
        %v316 = vsel %vm314, %v301, 0
        %318 = vmatprep.subr.bf16.mxu0 0
        %319 = vmatpush1.bf16.msra.mxu0 %v310
        %320 = vmatprep.subr.bf16.mxu0 0
        %321 = vmatpush1.bf16.msra.mxu0 %v311
        %322 = vmatprep.subr.bf16.mxu0 0
        %323 = vmatpush1.bf16.msra.mxu0 0
        %324 = vmatprep.subr.bf16.mxu0 0
        %325 = vmatpush1.bf16.msra.mxu0 0
        %326 = vmatprep.subr.bf16.mxu0 0
        %327 = vmatpush1.bf16.msra.mxu0 0
        %328 = vmatprep.subr.bf16.mxu0 0
        %329 = vmatpush1.bf16.msra.mxu0 0
        %330 = vmatprep.subr.bf16.mxu0 0
        %331 = vmatpush1.bf16.msra.mxu0 0
        %332 = vmatprep.subr.bf16.mxu0 0
        %333 = vmatpush1.bf16.msra.mxu0 0
        %334 = vmatprep.subr.bf16.mxu0 0
        %335 = vmatpush1.bf16.msra.mxu0 0
        %336 = vmatprep.subr.bf16.mxu0 0
        %337 = vmatpush1.bf16.msra.mxu0 0
        %338 = vmatprep.subr.bf16.mxu0 0
        %339 = vmatpush1.bf16.msra.mxu0 0
        %340 = vmatprep.subr.bf16.mxu0 0
        %341 = vmatpush1.bf16.msra.mxu0 0
        %342 = vmatprep.subr.bf16.mxu0 0
        %343 = vmatpush1.bf16.msra.mxu0 0
        %344 = vmatprep.subr.bf16.mxu0 0
        %345 = vmatpush1.bf16.msra.mxu0 0
        %346 = vmatprep.subr.bf16.mxu0 0
        %347 = vmatpush1.bf16.msra.mxu0 0
        %348 = vmatprep.subr.bf16.mxu0 0
        %349 = vmatpush1.bf16.msra.mxu0 0
        %350 = vmatprep.mubr.bf16.mxu0 0
        %351 = vmatmul.mubr.bf16.gmra.mrb[0].mxu0 %v316
        %v352 = vpop.f32.mrb[0].mxu0
        %v353 = vadd.f32 0.0, %v352
        %v354 = vpop.f32.mrb[0].mxu0
        %v355 = vpop.f32.mrb[0].mxu0
        %v356 = vadd.f32 0.0, %v355
        %v357 = vpop.f32.mrb[0].mxu0
        %358 = vdwg.mxu0
        %v359 = vld [vmem:[%s287] sm:$0xf]
        %v360 = vld [vmem:[%s287 + $0x4] sm:$0xf]
        %v361 = vld [vmem:[#allocation2] sm:$0xf]
        %v362 = vld [vmem:[#allocation2 + $0x4] sm:$0xf]
        %v363 = vld [vmem:[#allocation2 + $0x8] sm:$0xf]
        %v364 = vld [vmem:[#allocation2 + $0xc] sm:$0xf]
        %v367 = vunpack.c.l.b16 %v359
        %v368 = vunpack.c.l.b16 %v360
        %v369 = vpack.c.b16 %v368, %v367
        %v374 = vunpack.c.l.b16 %v361
        %v375 = vunpack.c.l.b16 %v362
        %v376 = vunpack.c.l.b16 %v363
        %v377 = vunpack.c.l.b16 %v364
        %v378 = vpack.c.b16 %v375, %v374
        %v379 = vpack.c.b16 %v377, %v376
        %v383 = vsel %vm314, %v369, 0
        %385 = vmatprep.subr.bf16.mxu0 0
        %386 = vmatpush1.bf16.msra.mxu0 %v378
        %387 = vmatprep.subr.bf16.mxu0 0
        %388 = vmatpush1.bf16.msra.mxu0 %v379
        %389 = vmatprep.subr.bf16.mxu0 0
        %390 = vmatpush1.bf16.msra.mxu0 0
        %391 = vmatprep.subr.bf16.mxu0 0
        %392 = vmatpush1.bf16.msra.mxu0 0
        %393 = vmatprep.subr.bf16.mxu0 0
        %394 = vmatpush1.bf16.msra.mxu0 0
        %395 = vmatprep.subr.bf16.mxu0 0
        %396 = vmatpush1.bf16.msra.mxu0 0
        %397 = vmatprep.subr.bf16.mxu0 0
        %398 = vmatpush1.bf16.msra.mxu0 0
        %399 = vmatprep.subr.bf16.mxu0 0
        %400 = vmatpush1.bf16.msra.mxu0 0
        %401 = vmatprep.subr.bf16.mxu0 0
        %402 = vmatpush1.bf16.msra.mxu0 0
        %403 = vmatprep.subr.bf16.mxu0 0
        %404 = vmatpush1.bf16.msra.mxu0 0
        %405 = vmatprep.subr.bf16.mxu0 0
        %406 = vmatpush1.bf16.msra.mxu0 0
        %407 = vmatprep.subr.bf16.mxu0 0
        %408 = vmatpush1.bf16.msra.mxu0 0
        %409 = vmatprep.subr.bf16.mxu0 0
        %410 = vmatpush1.bf16.msra.mxu0 0
        %411 = vmatprep.subr.bf16.mxu0 0
        %412 = vmatpush1.bf16.msra.mxu0 0
        %413 = vmatprep.subr.bf16.mxu0 0
        %414 = vmatpush1.bf16.msra.mxu0 0
        %415 = vmatprep.subr.bf16.mxu0 0
        %416 = vmatpush1.bf16.msra.mxu0 0
        %417 = vmatprep.mubr.bf16.mxu0 0
        %418 = vmatmul.mubr.bf16.gmra.mrb[0].mxu0 %v383
        %v419 = vpop.f32.mrb[0].mxu0
        %v420 = vadd.f32 0.0, %v419
        %v421 = vpop.f32.mrb[0].mxu0
        %v422 = vpop.f32.mrb[0].mxu0
        %v423 = vadd.f32 0.0, %v422
        %v424 = vpop.f32.mrb[0].mxu0
        %425 = vdwg.mxu0
        %428 = vrot.lane.b32.xlu0 %v353, 112
        %v429 = vpop.permute.xlu0 %428
        %430 = vrot.lane.b32.xlu0 %v356, 112
        %v431 = vpop.permute.xlu0 %430
        %432 = vrot.lane.b32.xlu0 %v353, 96
        %v433 = vpop.permute.xlu0 %432
        %434 = vrot.lane.b32.xlu0 %v356, 96
        %v435 = vpop.permute.xlu0 %434
        %436 = vrot.lane.b32.xlu0 %v353, 80
        %v437 = vpop.permute.xlu0 %436
        %438 = vrot.lane.b32.xlu0 %v356, 80
        %v439 = vpop.permute.xlu0 %438
        %442 = vrot.lane.b32.xlu0 %v420, 112
        %v443 = vpop.permute.xlu0 %442
        %444 = vrot.lane.b32.xlu0 %v423, 112
        %v445 = vpop.permute.xlu0 %444
        %446 = vrot.lane.b32.xlu0 %v420, 96
        %v447 = vpop.permute.xlu0 %446
        %448 = vrot.lane.b32.xlu0 %v423, 96
        %v449 = vpop.permute.xlu0 %448
        %450 = vrot.lane.b32.xlu0 %v420, 80
        %v451 = vpop.permute.xlu0 %450
        %452 = vrot.lane.b32.xlu0 %v423, 80
        %v453 = vpop.permute.xlu0 %452
        %vm454 = vcmask 130048
        %v455 = vsel %vm454, %v353, 0
        %v457 = vsel %vm454, %v420, 0
        %459 = vmatprep.subr.mxu0 0.0
        %460 = vmatpush1.xpose.msra.mxu0 %v457
        %461 = vmatprep.subr.mxu0 0.0
        %462 = vmatpush1.xpose.msra.mxu0 0.0
        %463 = vmatprep.subr.mxu0 0.0
        %464 = vmatpush1.xpose.msra.mxu0 0.0
        %465 = vmatprep.subr.mxu0 0.0
        %466 = vmatpush1.xpose.msra.mxu0 0.0
        %467 = vmatprep.subr.mxu0 0.0
        %468 = vmatpush1.xpose.msra.mxu0 0.0
        %469 = vmatprep.subr.mxu0 0.0
        %470 = vmatpush1.xpose.msra.mxu0 0.0
        %471 = vmatprep.subr.mxu0 0.0
        %472 = vmatpush1.xpose.msra.mxu0 0.0
        %473 = vmatprep.subr.mxu0 0.0
        %474 = vmatpush1.xpose.msra.mxu0 0.0
        %475 = vmatprep.subr.mxu0 0.0
        %476 = vmatpush1.xpose.msra.mxu0 0.0
        %477 = vmatprep.subr.mxu0 0.0
        %478 = vmatpush1.xpose.msra.mxu0 0.0
        %479 = vmatprep.subr.mxu0 0.0
        %480 = vmatpush1.xpose.msra.mxu0 0.0
        %481 = vmatprep.subr.mxu0 0.0
        %482 = vmatpush1.xpose.msra.mxu0 0.0
        %483 = vmatprep.subr.mxu0 0.0
        %484 = vmatpush1.xpose.msra.mxu0 0.0
        %485 = vmatprep.subr.mxu0 0.0
        %486 = vmatpush1.xpose.msra.mxu0 0.0
        %487 = vmatprep.subr.mxu0 0.0
        %488 = vmatpush1.xpose.msra.mxu0 0.0
        %489 = vmatprep.subr.mxu0 0.0
        %490 = vmatpush1.xpose.msra.mxu0 0.0
        %491 = vmatprep.subr.mxu0 0.0
        %492 = vmatpush1.xpose.msra.mxu0 0.0
        %493 = vmatprep.subr.mxu0 0.0
        %494 = vmatpush1.xpose.msra.mxu0 0.0
        %495 = vmatprep.subr.mxu0 0.0
        %496 = vmatpush1.xpose.msra.mxu0 0.0
        %497 = vmatprep.subr.mxu0 0.0
        %498 = vmatpush1.xpose.msra.mxu0 0.0
        %499 = vmatprep.subr.mxu0 0.0
        %500 = vmatpush1.xpose.msra.mxu0 0.0
        %501 = vmatprep.subr.mxu0 0.0
        %502 = vmatpush1.xpose.msra.mxu0 0.0
        %503 = vmatprep.subr.mxu0 0.0
        %504 = vmatpush1.xpose.msra.mxu0 0.0
        %505 = vmatprep.subr.mxu0 0.0
        %506 = vmatpush1.xpose.msra.mxu0 0.0
        %507 = vmatprep.subr.mxu0 0.0
        %508 = vmatpush1.xpose.msra.mxu0 0.0
        %509 = vmatprep.subr.mxu0 0.0
        %510 = vmatpush1.xpose.msra.mxu0 0.0
        %511 = vmatprep.subr.mxu0 0.0
        %512 = vmatpush1.xpose.msra.mxu0 0.0
        %513 = vmatprep.subr.mxu0 0.0
        %514 = vmatpush1.xpose.msra.mxu0 0.0
        %515 = vmatprep.subr.mxu0 0.0
        %516 = vmatpush1.xpose.msra.mxu0 0.0
        %517 = vmatprep.subr.mxu0 0.0
        %518 = vmatpush1.xpose.msra.mxu0 0.0
        %519 = vmatprep.subr.mxu0 0.0
        %520 = vmatpush1.xpose.msra.mxu0 0.0
        %521 = vmatprep.subr.mxu0 0.0
        %522 = vmatpush1.xpose.msra.mxu0 0.0
        %523 = vmatprep.mubr.f32.mxu0 0.0
        %524 = vmatmul.mubr.f32.gmra.mrb[0].mxu0 %v455
        %v525 = vpop.f32.mrb[0].mxu0
        %v526 = vadd.f32 0.0, %v525
        %v527 = vpop.f32.mrb[0].mxu0
        %528 = vdwg.mxu0
        %v529 = vsel %vm454, %v356, 0
        %v531 = vsel %vm454, %v423, 0
        %533 = vmatprep.subr.mxu0 0.0
        %534 = vmatpush1.xpose.msra.mxu0 %v531
        %535 = vmatprep.subr.mxu0 0.0
        %536 = vmatpush1.xpose.msra.mxu0 0.0
        %537 = vmatprep.subr.mxu0 0.0
        %538 = vmatpush1.xpose.msra.mxu0 0.0
        %539 = vmatprep.subr.mxu0 0.0
        %540 = vmatpush1.xpose.msra.mxu0 0.0
        %541 = vmatprep.subr.mxu0 0.0
        %542 = vmatpush1.xpose.msra.mxu0 0.0
        %543 = vmatprep.subr.mxu0 0.0
        %544 = vmatpush1.xpose.msra.mxu0 0.0
        %545 = vmatprep.subr.mxu0 0.0
        %546 = vmatpush1.xpose.msra.mxu0 0.0
        %547 = vmatprep.subr.mxu0 0.0
        %548 = vmatpush1.xpose.msra.mxu0 0.0
        %549 = vmatprep.subr.mxu0 0.0
        %550 = vmatpush1.xpose.msra.mxu0 0.0
        %551 = vmatprep.subr.mxu0 0.0
        %552 = vmatpush1.xpose.msra.mxu0 0.0
        %553 = vmatprep.subr.mxu0 0.0
        %554 = vmatpush1.xpose.msra.mxu0 0.0
        %555 = vmatprep.subr.mxu0 0.0
        %556 = vmatpush1.xpose.msra.mxu0 0.0
        %557 = vmatprep.subr.mxu0 0.0
        %558 = vmatpush1.xpose.msra.mxu0 0.0
        %559 = vmatprep.subr.mxu0 0.0
        %560 = vmatpush1.xpose.msra.mxu0 0.0
        %561 = vmatprep.subr.mxu0 0.0
        %562 = vmatpush1.xpose.msra.mxu0 0.0
        %563 = vmatprep.subr.mxu0 0.0
        %564 = vmatpush1.xpose.msra.mxu0 0.0
        %565 = vmatprep.subr.mxu0 0.0
        %566 = vmatpush1.xpose.msra.mxu0 0.0
        %567 = vmatprep.subr.mxu0 0.0
        %568 = vmatpush1.xpose.msra.mxu0 0.0
        %569 = vmatprep.subr.mxu0 0.0
        %570 = vmatpush1.xpose.msra.mxu0 0.0
        %571 = vmatprep.subr.mxu0 0.0
        %572 = vmatpush1.xpose.msra.mxu0 0.0
        %573 = vmatprep.subr.mxu0 0.0
        %574 = vmatpush1.xpose.msra.mxu0 0.0
        %575 = vmatprep.subr.mxu0 0.0
        %576 = vmatpush1.xpose.msra.mxu0 0.0
        %577 = vmatprep.subr.mxu0 0.0
        %578 = vmatpush1.xpose.msra.mxu0 0.0
        %579 = vmatprep.subr.mxu0 0.0
        %580 = vmatpush1.xpose.msra.mxu0 0.0
        %581 = vmatprep.subr.mxu0 0.0
        %582 = vmatpush1.xpose.msra.mxu0 0.0
        %583 = vmatprep.subr.mxu0 0.0
        %584 = vmatpush1.xpose.msra.mxu0 0.0
        %585 = vmatprep.subr.mxu0 0.0
        %586 = vmatpush1.xpose.msra.mxu0 0.0
        %587 = vmatprep.subr.mxu0 0.0
        %588 = vmatpush1.xpose.msra.mxu0 0.0
        %589 = vmatprep.subr.mxu0 0.0
        %590 = vmatpush1.xpose.msra.mxu0 0.0
        %591 = vmatprep.subr.mxu0 0.0
        %592 = vmatpush1.xpose.msra.mxu0 0.0
        %593 = vmatprep.subr.mxu0 0.0
        %594 = vmatpush1.xpose.msra.mxu0 0.0
        %595 = vmatprep.subr.mxu0 0.0
        %596 = vmatpush1.xpose.msra.mxu0 0.0
        %597 = vmatprep.mubr.f32.mxu0 0.0
        %598 = vmatmul.mubr.f32.gmra.mrb[0].mxu0 %v529
        %v599 = vpop.f32.mrb[0].mxu0
        %v600 = vadd.f32 0.0, %v599
        %v601 = vpop.f32.mrb[0].mxu0
        %602 = vdwg.mxu0
        %v603 = vsel %vm454, %v429, 0
        %v605 = vsel %vm454, %v443, 0
        %607 = vmatprep.subr.mxu0 0.0
        %608 = vmatpush1.xpose.msra.mxu0 %v605
        %609 = vmatprep.subr.mxu0 0.0
        %610 = vmatpush1.xpose.msra.mxu0 0.0
        %611 = vmatprep.subr.mxu0 0.0
        %612 = vmatpush1.xpose.msra.mxu0 0.0
        %613 = vmatprep.subr.mxu0 0.0
        %614 = vmatpush1.xpose.msra.mxu0 0.0
        %615 = vmatprep.subr.mxu0 0.0
        %616 = vmatpush1.xpose.msra.mxu0 0.0
        %617 = vmatprep.subr.mxu0 0.0
        %618 = vmatpush1.xpose.msra.mxu0 0.0
        %619 = vmatprep.subr.mxu0 0.0
        %620 = vmatpush1.xpose.msra.mxu0 0.0
        %621 = vmatprep.subr.mxu0 0.0
        %622 = vmatpush1.xpose.msra.mxu0 0.0
        %623 = vmatprep.subr.mxu0 0.0
        %624 = vmatpush1.xpose.msra.mxu0 0.0
        %625 = vmatprep.subr.mxu0 0.0
        %626 = vmatpush1.xpose.msra.mxu0 0.0
        %627 = vmatprep.subr.mxu0 0.0
        %628 = vmatpush1.xpose.msra.mxu0 0.0
        %629 = vmatprep.subr.mxu0 0.0
        %630 = vmatpush1.xpose.msra.mxu0 0.0
        %631 = vmatprep.subr.mxu0 0.0
        %632 = vmatpush1.xpose.msra.mxu0 0.0
        %633 = vmatprep.subr.mxu0 0.0
        %634 = vmatpush1.xpose.msra.mxu0 0.0
        %635 = vmatprep.subr.mxu0 0.0
        %636 = vmatpush1.xpose.msra.mxu0 0.0
        %637 = vmatprep.subr.mxu0 0.0
        %638 = vmatpush1.xpose.msra.mxu0 0.0
        %639 = vmatprep.subr.mxu0 0.0
        %640 = vmatpush1.xpose.msra.mxu0 0.0
        %641 = vmatprep.subr.mxu0 0.0
        %642 = vmatpush1.xpose.msra.mxu0 0.0
        %643 = vmatprep.subr.mxu0 0.0
        %644 = vmatpush1.xpose.msra.mxu0 0.0
        %645 = vmatprep.subr.mxu0 0.0
        %646 = vmatpush1.xpose.msra.mxu0 0.0
        %647 = vmatprep.subr.mxu0 0.0
        %648 = vmatpush1.xpose.msra.mxu0 0.0
        %649 = vmatprep.subr.mxu0 0.0
        %650 = vmatpush1.xpose.msra.mxu0 0.0
        %651 = vmatprep.subr.mxu0 0.0
        %652 = vmatpush1.xpose.msra.mxu0 0.0
        %653 = vmatprep.subr.mxu0 0.0
        %654 = vmatpush1.xpose.msra.mxu0 0.0
        %655 = vmatprep.subr.mxu0 0.0
        %656 = vmatpush1.xpose.msra.mxu0 0.0
        %657 = vmatprep.subr.mxu0 0.0
        %658 = vmatpush1.xpose.msra.mxu0 0.0
        %659 = vmatprep.subr.mxu0 0.0
        %660 = vmatpush1.xpose.msra.mxu0 0.0
        %661 = vmatprep.subr.mxu0 0.0
        %662 = vmatpush1.xpose.msra.mxu0 0.0
        %663 = vmatprep.subr.mxu0 0.0
        %664 = vmatpush1.xpose.msra.mxu0 0.0
        %665 = vmatprep.subr.mxu0 0.0
        %666 = vmatpush1.xpose.msra.mxu0 0.0
        %667 = vmatprep.subr.mxu0 0.0
        %668 = vmatpush1.xpose.msra.mxu0 0.0
        %669 = vmatprep.subr.mxu0 0.0
        %670 = vmatpush1.xpose.msra.mxu0 0.0
        %671 = vmatprep.mubr.f32.mxu0 0.0
        %672 = vmatmul.mubr.f32.gmra.mrb[0].mxu0 %v603
        %v673 = vpop.f32.mrb[0].mxu0
        %v674 = vadd.f32 0.0, %v673
        %v675 = vpop.f32.mrb[0].mxu0
        %676 = vdwg.mxu0
        %v677 = vsel %vm454, %v431, 0
        %v679 = vsel %vm454, %v445, 0
        %681 = vmatprep.subr.mxu0 0.0
        %682 = vmatpush1.xpose.msra.mxu0 %v679
        %683 = vmatprep.subr.mxu0 0.0
        %684 = vmatpush1.xpose.msra.mxu0 0.0
        %685 = vmatprep.subr.mxu0 0.0
        %686 = vmatpush1.xpose.msra.mxu0 0.0
        %687 = vmatprep.subr.mxu0 0.0
        %688 = vmatpush1.xpose.msra.mxu0 0.0
        %689 = vmatprep.subr.mxu0 0.0
        %690 = vmatpush1.xpose.msra.mxu0 0.0
        %691 = vmatprep.subr.mxu0 0.0
        %692 = vmatpush1.xpose.msra.mxu0 0.0
        %693 = vmatprep.subr.mxu0 0.0
        %694 = vmatpush1.xpose.msra.mxu0 0.0
        %695 = vmatprep.subr.mxu0 0.0
        %696 = vmatpush1.xpose.msra.mxu0 0.0
        %697 = vmatprep.subr.mxu0 0.0
        %698 = vmatpush1.xpose.msra.mxu0 0.0
        %699 = vmatprep.subr.mxu0 0.0
        %700 = vmatpush1.xpose.msra.mxu0 0.0
        %701 = vmatprep.subr.mxu0 0.0
        %702 = vmatpush1.xpose.msra.mxu0 0.0
        %703 = vmatprep.subr.mxu0 0.0
        %704 = vmatpush1.xpose.msra.mxu0 0.0
        %705 = vmatprep.subr.mxu0 0.0
        %706 = vmatpush1.xpose.msra.mxu0 0.0
        %707 = vmatprep.subr.mxu0 0.0
        %708 = vmatpush1.xpose.msra.mxu0 0.0
        %709 = vmatprep.subr.mxu0 0.0
        %710 = vmatpush1.xpose.msra.mxu0 0.0
        %711 = vmatprep.subr.mxu0 0.0
        %712 = vmatpush1.xpose.msra.mxu0 0.0
        %713 = vmatprep.subr.mxu0 0.0
        %714 = vmatpush1.xpose.msra.mxu0 0.0
        %715 = vmatprep.subr.mxu0 0.0
        %716 = vmatpush1.xpose.msra.mxu0 0.0
        %717 = vmatprep.subr.mxu0 0.0
        %718 = vmatpush1.xpose.msra.mxu0 0.0
        %719 = vmatprep.subr.mxu0 0.0
        %720 = vmatpush1.xpose.msra.mxu0 0.0
        %721 = vmatprep.subr.mxu0 0.0
        %722 = vmatpush1.xpose.msra.mxu0 0.0
        %723 = vmatprep.subr.mxu0 0.0
        %724 = vmatpush1.xpose.msra.mxu0 0.0
        %725 = vmatprep.subr.mxu0 0.0
        %726 = vmatpush1.xpose.msra.mxu0 0.0
        %727 = vmatprep.subr.mxu0 0.0
        %728 = vmatpush1.xpose.msra.mxu0 0.0
        %729 = vmatprep.subr.mxu0 0.0
        %730 = vmatpush1.xpose.msra.mxu0 0.0
        %731 = vmatprep.subr.mxu0 0.0
        %732 = vmatpush1.xpose.msra.mxu0 0.0
        %733 = vmatprep.subr.mxu0 0.0
        %734 = vmatpush1.xpose.msra.mxu0 0.0
        %735 = vmatprep.subr.mxu0 0.0
        %736 = vmatpush1.xpose.msra.mxu0 0.0
        %737 = vmatprep.subr.mxu0 0.0
        %738 = vmatpush1.xpose.msra.mxu0 0.0
        %739 = vmatprep.subr.mxu0 0.0
        %740 = vmatpush1.xpose.msra.mxu0 0.0
        %741 = vmatprep.subr.mxu0 0.0
        %742 = vmatpush1.xpose.msra.mxu0 0.0
        %743 = vmatprep.subr.mxu0 0.0
        %744 = vmatpush1.xpose.msra.mxu0 0.0
        %745 = vmatprep.mubr.f32.mxu0 0.0
        %746 = vmatmul.mubr.f32.gmra.mrb[0].mxu0 %v677
        %v747 = vpop.f32.mrb[0].mxu0
        %v748 = vadd.f32 0.0, %v747
        %v749 = vpop.f32.mrb[0].mxu0
        %750 = vdwg.mxu0
        %v751 = vsel %vm454, %v433, 0
        %v753 = vsel %vm454, %v447, 0
        %755 = vmatprep.subr.mxu0 0.0
        %756 = vmatpush1.xpose.msra.mxu0 %v753
        %757 = vmatprep.subr.mxu0 0.0
        %758 = vmatpush1.xpose.msra.mxu0 0.0
        %759 = vmatprep.subr.mxu0 0.0
        %760 = vmatpush1.xpose.msra.mxu0 0.0
        %761 = vmatprep.subr.mxu0 0.0
        %762 = vmatpush1.xpose.msra.mxu0 0.0
        %763 = vmatprep.subr.mxu0 0.0
        %764 = vmatpush1.xpose.msra.mxu0 0.0
        %765 = vmatprep.subr.mxu0 0.0
        %766 = vmatpush1.xpose.msra.mxu0 0.0
        %767 = vmatprep.subr.mxu0 0.0
        %768 = vmatpush1.xpose.msra.mxu0 0.0
        %769 = vmatprep.subr.mxu0 0.0
        %770 = vmatpush1.xpose.msra.mxu0 0.0
        %771 = vmatprep.subr.mxu0 0.0
        %772 = vmatpush1.xpose.msra.mxu0 0.0
        %773 = vmatprep.subr.mxu0 0.0
        %774 = vmatpush1.xpose.msra.mxu0 0.0
        %775 = vmatprep.subr.mxu0 0.0
        %776 = vmatpush1.xpose.msra.mxu0 0.0
        %777 = vmatprep.subr.mxu0 0.0
        %778 = vmatpush1.xpose.msra.mxu0 0.0
        %779 = vmatprep.subr.mxu0 0.0
        %780 = vmatpush1.xpose.msra.mxu0 0.0
        %781 = vmatprep.subr.mxu0 0.0
        %782 = vmatpush1.xpose.msra.mxu0 0.0
        %783 = vmatprep.subr.mxu0 0.0
        %784 = vmatpush1.xpose.msra.mxu0 0.0
        %785 = vmatprep.subr.mxu0 0.0
        %786 = vmatpush1.xpose.msra.mxu0 0.0
        %787 = vmatprep.subr.mxu0 0.0
        %788 = vmatpush1.xpose.msra.mxu0 0.0
        %789 = vmatprep.subr.mxu0 0.0
        %790 = vmatpush1.xpose.msra.mxu0 0.0
        %791 = vmatprep.subr.mxu0 0.0
        %792 = vmatpush1.xpose.msra.mxu0 0.0
        %793 = vmatprep.subr.mxu0 0.0
        %794 = vmatpush1.xpose.msra.mxu0 0.0
        %795 = vmatprep.subr.mxu0 0.0
        %796 = vmatpush1.xpose.msra.mxu0 0.0
        %797 = vmatprep.subr.mxu0 0.0
        %798 = vmatpush1.xpose.msra.mxu0 0.0
        %799 = vmatprep.subr.mxu0 0.0
        %800 = vmatpush1.xpose.msra.mxu0 0.0
        %801 = vmatprep.subr.mxu0 0.0
        %802 = vmatpush1.xpose.msra.mxu0 0.0
        %803 = vmatprep.subr.mxu0 0.0
        %804 = vmatpush1.xpose.msra.mxu0 0.0
        %805 = vmatprep.subr.mxu0 0.0
        %806 = vmatpush1.xpose.msra.mxu0 0.0
        %807 = vmatprep.subr.mxu0 0.0
        %808 = vmatpush1.xpose.msra.mxu0 0.0
        %809 = vmatprep.subr.mxu0 0.0
        %810 = vmatpush1.xpose.msra.mxu0 0.0
        %811 = vmatprep.subr.mxu0 0.0
        %812 = vmatpush1.xpose.msra.mxu0 0.0
        %813 = vmatprep.subr.mxu0 0.0
        %814 = vmatpush1.xpose.msra.mxu0 0.0
        %815 = vmatprep.subr.mxu0 0.0
        %816 = vmatpush1.xpose.msra.mxu0 0.0
        %817 = vmatprep.subr.mxu0 0.0
        %818 = vmatpush1.xpose.msra.mxu0 0.0
        %819 = vmatprep.mubr.f32.mxu0 0.0
        %820 = vmatmul.mubr.f32.gmra.mrb[0].mxu0 %v751
        %v821 = vpop.f32.mrb[0].mxu0
        %v822 = vadd.f32 0.0, %v821
        %v823 = vpop.f32.mrb[0].mxu0
        %824 = vdwg.mxu0
        %v825 = vsel %vm454, %v435, 0
        %v827 = vsel %vm454, %v449, 0
        %829 = vmatprep.subr.mxu0 0.0
        %830 = vmatpush1.xpose.msra.mxu0 %v827
        %831 = vmatprep.subr.mxu0 0.0
        %832 = vmatpush1.xpose.msra.mxu0 0.0
        %833 = vmatprep.subr.mxu0 0.0
        %834 = vmatpush1.xpose.msra.mxu0 0.0
        %835 = vmatprep.subr.mxu0 0.0
        %836 = vmatpush1.xpose.msra.mxu0 0.0
        %837 = vmatprep.subr.mxu0 0.0
        %838 = vmatpush1.xpose.msra.mxu0 0.0
        %839 = vmatprep.subr.mxu0 0.0
        %840 = vmatpush1.xpose.msra.mxu0 0.0
        %841 = vmatprep.subr.mxu0 0.0
        %842 = vmatpush1.xpose.msra.mxu0 0.0
        %843 = vmatprep.subr.mxu0 0.0
        %844 = vmatpush1.xpose.msra.mxu0 0.0
        %845 = vmatprep.subr.mxu0 0.0
        %846 = vmatpush1.xpose.msra.mxu0 0.0
        %847 = vmatprep.subr.mxu0 0.0
        %848 = vmatpush1.xpose.msra.mxu0 0.0
        %849 = vmatprep.subr.mxu0 0.0
        %850 = vmatpush1.xpose.msra.mxu0 0.0
        %851 = vmatprep.subr.mxu0 0.0
        %852 = vmatpush1.xpose.msra.mxu0 0.0
        %853 = vmatprep.subr.mxu0 0.0
        %854 = vmatpush1.xpose.msra.mxu0 0.0
        %855 = vmatprep.subr.mxu0 0.0
        %856 = vmatpush1.xpose.msra.mxu0 0.0
        %857 = vmatprep.subr.mxu0 0.0
        %858 = vmatpush1.xpose.msra.mxu0 0.0
        %859 = vmatprep.subr.mxu0 0.0
        %860 = vmatpush1.xpose.msra.mxu0 0.0
        %861 = vmatprep.subr.mxu0 0.0
        %862 = vmatpush1.xpose.msra.mxu0 0.0
        %863 = vmatprep.subr.mxu0 0.0
        %864 = vmatpush1.xpose.msra.mxu0 0.0
        %865 = vmatprep.subr.mxu0 0.0
        %866 = vmatpush1.xpose.msra.mxu0 0.0
        %867 = vmatprep.subr.mxu0 0.0
        %868 = vmatpush1.xpose.msra.mxu0 0.0
        %869 = vmatprep.subr.mxu0 0.0
        %870 = vmatpush1.xpose.msra.mxu0 0.0
        %871 = vmatprep.subr.mxu0 0.0
        %872 = vmatpush1.xpose.msra.mxu0 0.0
        %873 = vmatprep.subr.mxu0 0.0
        %874 = vmatpush1.xpose.msra.mxu0 0.0
        %875 = vmatprep.subr.mxu0 0.0
        %876 = vmatpush1.xpose.msra.mxu0 0.0
        %877 = vmatprep.subr.mxu0 0.0
        %878 = vmatpush1.xpose.msra.mxu0 0.0
        %879 = vmatprep.subr.mxu0 0.0
        %880 = vmatpush1.xpose.msra.mxu0 0.0
        %881 = vmatprep.subr.mxu0 0.0
        %882 = vmatpush1.xpose.msra.mxu0 0.0
        %883 = vmatprep.subr.mxu0 0.0
        %884 = vmatpush1.xpose.msra.mxu0 0.0
        %885 = vmatprep.subr.mxu0 0.0
        %886 = vmatpush1.xpose.msra.mxu0 0.0
        %887 = vmatprep.subr.mxu0 0.0
        %888 = vmatpush1.xpose.msra.mxu0 0.0
        %889 = vmatprep.subr.mxu0 0.0
        %890 = vmatpush1.xpose.msra.mxu0 0.0
        %891 = vmatprep.subr.mxu0 0.0
        %892 = vmatpush1.xpose.msra.mxu0 0.0
        %893 = vmatprep.mubr.f32.mxu0 0.0
        %894 = vmatmul.mubr.f32.gmra.mrb[0].mxu0 %v825
        %v895 = vpop.f32.mrb[0].mxu0
        %v896 = vadd.f32 0.0, %v895
        %v897 = vpop.f32.mrb[0].mxu0
        %898 = vdwg.mxu0
        %v899 = vsel %vm454, %v437, 0
        %v901 = vsel %vm454, %v451, 0
        %903 = vmatprep.subr.mxu0 0.0
        %904 = vmatpush1.xpose.msra.mxu0 %v901
        %905 = vmatprep.subr.mxu0 0.0
        %906 = vmatpush1.xpose.msra.mxu0 0.0
        %907 = vmatprep.subr.mxu0 0.0
        %908 = vmatpush1.xpose.msra.mxu0 0.0
        %909 = vmatprep.subr.mxu0 0.0
        %910 = vmatpush1.xpose.msra.mxu0 0.0
        %911 = vmatprep.subr.mxu0 0.0
        %912 = vmatpush1.xpose.msra.mxu0 0.0
        %913 = vmatprep.subr.mxu0 0.0
        %914 = vmatpush1.xpose.msra.mxu0 0.0
        %915 = vmatprep.subr.mxu0 0.0
        %916 = vmatpush1.xpose.msra.mxu0 0.0
        %917 = vmatprep.subr.mxu0 0.0
        %918 = vmatpush1.xpose.msra.mxu0 0.0
        %919 = vmatprep.subr.mxu0 0.0
        %920 = vmatpush1.xpose.msra.mxu0 0.0
        %921 = vmatprep.subr.mxu0 0.0
        %922 = vmatpush1.xpose.msra.mxu0 0.0
        %923 = vmatprep.subr.mxu0 0.0
        %924 = vmatpush1.xpose.msra.mxu0 0.0
        %925 = vmatprep.subr.mxu0 0.0
        %926 = vmatpush1.xpose.msra.mxu0 0.0
        %927 = vmatprep.subr.mxu0 0.0
        %928 = vmatpush1.xpose.msra.mxu0 0.0
        %929 = vmatprep.subr.mxu0 0.0
        %930 = vmatpush1.xpose.msra.mxu0 0.0
        %931 = vmatprep.subr.mxu0 0.0
        %932 = vmatpush1.xpose.msra.mxu0 0.0
        %933 = vmatprep.subr.mxu0 0.0
        %934 = vmatpush1.xpose.msra.mxu0 0.0
        %935 = vmatprep.subr.mxu0 0.0
        %936 = vmatpush1.xpose.msra.mxu0 0.0
        %937 = vmatprep.subr.mxu0 0.0
        %938 = vmatpush1.xpose.msra.mxu0 0.0
        %939 = vmatprep.subr.mxu0 0.0
        %940 = vmatpush1.xpose.msra.mxu0 0.0
        %941 = vmatprep.subr.mxu0 0.0
        %942 = vmatpush1.xpose.msra.mxu0 0.0
        %943 = vmatprep.subr.mxu0 0.0
        %944 = vmatpush1.xpose.msra.mxu0 0.0
        %945 = vmatprep.subr.mxu0 0.0
        %946 = vmatpush1.xpose.msra.mxu0 0.0
        %947 = vmatprep.subr.mxu0 0.0
        %948 = vmatpush1.xpose.msra.mxu0 0.0
        %949 = vmatprep.subr.mxu0 0.0
        %950 = vmatpush1.xpose.msra.mxu0 0.0
        %951 = vmatprep.subr.mxu0 0.0
        %952 = vmatpush1.xpose.msra.mxu0 0.0
        %953 = vmatprep.subr.mxu0 0.0
        %954 = vmatpush1.xpose.msra.mxu0 0.0
        %955 = vmatprep.subr.mxu0 0.0
        %956 = vmatpush1.xpose.msra.mxu0 0.0
        %957 = vmatprep.subr.mxu0 0.0
        %958 = vmatpush1.xpose.msra.mxu0 0.0
        %959 = vmatprep.subr.mxu0 0.0
        %960 = vmatpush1.xpose.msra.mxu0 0.0
        %961 = vmatprep.subr.mxu0 0.0
        %962 = vmatpush1.xpose.msra.mxu0 0.0
        %963 = vmatprep.subr.mxu0 0.0
        %964 = vmatpush1.xpose.msra.mxu0 0.0
        %965 = vmatprep.subr.mxu0 0.0
        %966 = vmatpush1.xpose.msra.mxu0 0.0
        %967 = vmatprep.mubr.f32.mxu0 0.0
        %968 = vmatmul.mubr.f32.gmra.mrb[0].mxu0 %v899
        %v969 = vpop.f32.mrb[0].mxu0
        %v970 = vadd.f32 0.0, %v969
        %v971 = vpop.f32.mrb[0].mxu0
        %972 = vdwg.mxu0
        %v973 = vsel %vm454, %v439, 0
        %v975 = vsel %vm454, %v453, 0
        %977 = vmatprep.subr.mxu0 0.0
        %978 = vmatpush1.xpose.msra.mxu0 %v975
        %979 = vmatprep.subr.mxu0 0.0
        %980 = vmatpush1.xpose.msra.mxu0 0.0
        %981 = vmatprep.subr.mxu0 0.0
        %982 = vmatpush1.xpose.msra.mxu0 0.0
        %983 = vmatprep.subr.mxu0 0.0
        %984 = vmatpush1.xpose.msra.mxu0 0.0
        %985 = vmatprep.subr.mxu0 0.0
        %986 = vmatpush1.xpose.msra.mxu0 0.0
        %987 = vmatprep.subr.mxu0 0.0
        %988 = vmatpush1.xpose.msra.mxu0 0.0
        %989 = vmatprep.subr.mxu0 0.0
        %990 = vmatpush1.xpose.msra.mxu0 0.0
        %991 = vmatprep.subr.mxu0 0.0
        %992 = vmatpush1.xpose.msra.mxu0 0.0
        %993 = vmatprep.subr.mxu0 0.0
        %994 = vmatpush1.xpose.msra.mxu0 0.0
        %995 = vmatprep.subr.mxu0 0.0
        %996 = vmatpush1.xpose.msra.mxu0 0.0
        %997 = vmatprep.subr.mxu0 0.0
        %998 = vmatpush1.xpose.msra.mxu0 0.0
        %999 = vmatprep.subr.mxu0 0.0
        %1000 = vmatpush1.xpose.msra.mxu0 0.0
        %1001 = vmatprep.subr.mxu0 0.0
        %1002 = vmatpush1.xpose.msra.mxu0 0.0
        %1003 = vmatprep.subr.mxu0 0.0
        %1004 = vmatpush1.xpose.msra.mxu0 0.0
        %1005 = vmatprep.subr.mxu0 0.0
        %1006 = vmatpush1.xpose.msra.mxu0 0.0
        %1007 = vmatprep.subr.mxu0 0.0
        %1008 = vmatpush1.xpose.msra.mxu0 0.0
        %1009 = vmatprep.subr.mxu0 0.0
        %1010 = vmatpush1.xpose.msra.mxu0 0.0
        %1011 = vmatprep.subr.mxu0 0.0
        %1012 = vmatpush1.xpose.msra.mxu0 0.0
        %1013 = vmatprep.subr.mxu0 0.0
        %1014 = vmatpush1.xpose.msra.mxu0 0.0
        %1015 = vmatprep.subr.mxu0 0.0
        %1016 = vmatpush1.xpose.msra.mxu0 0.0
        %1017 = vmatprep.subr.mxu0 0.0
        %1018 = vmatpush1.xpose.msra.mxu0 0.0
        %1019 = vmatprep.subr.mxu0 0.0
        %1020 = vmatpush1.xpose.msra.mxu0 0.0
        %1021 = vmatprep.subr.mxu0 0.0
        %1022 = vmatpush1.xpose.msra.mxu0 0.0
        %1023 = vmatprep.subr.mxu0 0.0
        %1024 = vmatpush1.xpose.msra.mxu0 0.0
        %1025 = vmatprep.subr.mxu0 0.0
        %1026 = vmatpush1.xpose.msra.mxu0 0.0
        %1027 = vmatprep.subr.mxu0 0.0
        %1028 = vmatpush1.xpose.msra.mxu0 0.0
        %1029 = vmatprep.subr.mxu0 0.0
        %1030 = vmatpush1.xpose.msra.mxu0 0.0
        %1031 = vmatprep.subr.mxu0 0.0
        %1032 = vmatpush1.xpose.msra.mxu0 0.0
        %1033 = vmatprep.subr.mxu0 0.0
        %1034 = vmatpush1.xpose.msra.mxu0 0.0
        %1035 = vmatprep.subr.mxu0 0.0
        %1036 = vmatpush1.xpose.msra.mxu0 0.0
        %1037 = vmatprep.subr.mxu0 0.0
        %1038 = vmatpush1.xpose.msra.mxu0 0.0
        %1039 = vmatprep.subr.mxu0 0.0
        %1040 = vmatpush1.xpose.msra.mxu0 0.0
        %1041 = vmatprep.mubr.f32.mxu0 0.0
        %1042 = vmatmul.mubr.f32.gmra.mrb[0].mxu0 %v973
        %v1043 = vpop.f32.mrb[0].mxu0
        %v1044 = vadd.f32 0.0, %v1043
        %v1045 = vpop.f32.mrb[0].mxu0
        %1046 = vdwg.mxu0
        %v1047 = vmul.f32 %v526, 0.25
        %v1048 = vmul.f32 %v600, 0.25
        %v1049 = vmul.f32 %v674, 0.25
        %v1050 = vmul.f32 %v748, 0.25
        %v1051 = vmul.f32 %v822, 0.25
        %v1052 = vmul.f32 %v896, 0.25
        %v1053 = vmul.f32 %v970, 0.25
        %v1054 = vmul.f32 %v1044, 0.25
        %vm1055 = vcmask 64512
        %v1056 = vsel %vm1055, %v1047, -inf
        %1057 = vmax.xlane.f32.xlu0 %v1056
        %v1058 = vpop.xlane.xlu0 %1057
        %v1059 = vsel %vm1055, %v1048, -inf
        %1060 = vmax.xlane.f32.xlu0 %v1059
        %v1061 = vpop.xlane.xlu0 %1060
        %v1062 = vsel %vm1055, %v1049, -inf
        %1063 = vmax.xlane.f32.xlu0 %v1062
        %v1064 = vpop.xlane.xlu0 %1063
        %v1065 = vsel %vm1055, %v1050, -inf
        %1066 = vmax.xlane.f32.xlu0 %v1065
        %v1067 = vpop.xlane.xlu0 %1066
        %v1068 = vsel %vm1055, %v1051, -inf
        %1069 = vmax.xlane.f32.xlu0 %v1068
        %v1070 = vpop.xlane.xlu0 %1069
        %v1071 = vsel %vm1055, %v1052, -inf
        %1072 = vmax.xlane.f32.xlu0 %v1071
        %v1073 = vpop.xlane.xlu0 %1072
        %v1074 = vsel %vm1055, %v1053, -inf
        %1075 = vmax.xlane.f32.xlu0 %v1074
        %v1076 = vpop.xlane.xlu0 %1075
        %v1077 = vsel %vm1055, %v1054, -inf
        %1078 = vmax.xlane.f32.xlu0 %v1077
        %v1079 = vpop.xlane.xlu0 %1078
        %v1080 = vsub.f32 %v1047, %v1058
        %v1081 = vsub.f32 %v1048, %v1061
        %v1082 = vsub.f32 %v1049, %v1064
        %v1083 = vsub.f32 %v1050, %v1067
        %v1084 = vsub.f32 %v1051, %v1070
        %v1085 = vsub.f32 %v1052, %v1073
        %v1086 = vsub.f32 %v1053, %v1076
        %v1087 = vsub.f32 %v1054, %v1079
        %v1088 = vmul.f32 %v1080, 1.442695
        %v1089 = vpow.pop %v1088
        %v1090 = vmul.f32 %v1081, 1.442695
        %v1091 = vpow.pop %v1090
        %v1092 = vmul.f32 %v1082, 1.442695
        %v1093 = vpow.pop %v1092
        %v1094 = vmul.f32 %v1083, 1.442695
        %v1095 = vpow.pop %v1094
        %v1096 = vmul.f32 %v1084, 1.442695
        %v1097 = vpow.pop %v1096
        %v1098 = vmul.f32 %v1085, 1.442695
        %v1099 = vpow.pop %v1098
        %v1100 = vmul.f32 %v1086, 1.442695
        %v1101 = vpow.pop %v1100
        %v1102 = vmul.f32 %v1087, 1.442695
        %v1103 = vpow.pop %v1102
        %v1104 = vsel %vm1055, %v1089, 0.0
        %1105 = vadd.xlane.f32.xlu0 %v1104
        %v1106 = vpop.xlane.xlu0 %1105
        %v1107 = vsel %vm1055, %v1091, 0.0
        %1108 = vadd.xlane.f32.xlu0 %v1107
        %v1109 = vpop.xlane.xlu0 %1108
        %v1110 = vsel %vm1055, %v1093, 0.0
        %1111 = vadd.xlane.f32.xlu0 %v1110
        %v1112 = vpop.xlane.xlu0 %1111
        %v1113 = vsel %vm1055, %v1095, 0.0
        %1114 = vadd.xlane.f32.xlu0 %v1113
        %v1115 = vpop.xlane.xlu0 %1114
        %v1116 = vsel %vm1055, %v1097, 0.0
        %1117 = vadd.xlane.f32.xlu0 %v1116
        %v1118 = vpop.xlane.xlu0 %1117
        %v1119 = vsel %vm1055, %v1099, 0.0
        %1120 = vadd.xlane.f32.xlu0 %v1119
        %v1121 = vpop.xlane.xlu0 %1120
        %v1122 = vsel %vm1055, %v1101, 0.0
        %1123 = vadd.xlane.f32.xlu0 %v1122
        %v1124 = vpop.xlane.xlu0 %1123
        %v1125 = vsel %vm1055, %v1103, 0.0
        %1126 = vadd.xlane.f32.xlu0 %v1125
        %v1127 = vpop.xlane.xlu0 %1126
        %v1128 = vrcp.pop %v1106
        %v1129 = vrcp.pop %v1109
        %v1130 = vrcp.pop %v1112
        %v1131 = vrcp.pop %v1115
        %v1132 = vrcp.pop %v1118
        %v1133 = vrcp.pop %v1121
        %v1134 = vrcp.pop %v1124
        %v1135 = vrcp.pop %v1127
        %v1136 = vmul.f32 %v1089, %v1128
        %v1137 = vmul.f32 %v1091, %v1129
        %v1138 = vmul.f32 %v1093, %v1130
        %v1139 = vmul.f32 %v1095, %v1131
        %v1140 = vmul.f32 %v1097, %v1132
        %v1141 = vmul.f32 %v1099, %v1133
        %v1142 = vmul.f32 %v1101, %v1134
        %v1143 = vmul.f32 %v1103, %v1135
        %1144 = vrot.lane.b32.xlu0 %v420, 64
        %v1145 = vpop.permute.xlu0 %1144
        %v1148 = vsel %vm1055, %v1136, 0
        %1150 = vmatprep.subr.mxu0 0.0
        %1151 = vmatpush1.msra.mxu0 %v1145
        %1152 = vmatprep.subr.mxu0 0.0
        %1153 = vmatpush1.msra.mxu0 0.0
        %1154 = vmatprep.subr.mxu0 0.0
        %1155 = vmatpush1.msra.mxu0 0.0
        %1156 = vmatprep.subr.mxu0 0.0
        %1157 = vmatpush1.msra.mxu0 0.0
        %1158 = vmatprep.subr.mxu0 0.0
        %1159 = vmatpush1.msra.mxu0 0.0
        %1160 = vmatprep.subr.mxu0 0.0
        %1161 = vmatpush1.msra.mxu0 0.0
        %1162 = vmatprep.subr.mxu0 0.0
        %1163 = vmatpush1.msra.mxu0 0.0
        %1164 = vmatprep.subr.mxu0 0.0
        %1165 = vmatpush1.msra.mxu0 0.0
        %1166 = vmatprep.subr.mxu0 0.0
        %1167 = vmatpush1.msra.mxu0 0.0
        %1168 = vmatprep.subr.mxu0 0.0
        %1169 = vmatpush1.msra.mxu0 0.0
        %1170 = vmatprep.subr.mxu0 0.0
        %1171 = vmatpush1.msra.mxu0 0.0
        %1172 = vmatprep.subr.mxu0 0.0
        %1173 = vmatpush1.msra.mxu0 0.0
        %1174 = vmatprep.subr.mxu0 0.0
        %1175 = vmatpush1.msra.mxu0 0.0
        %1176 = vmatprep.subr.mxu0 0.0
        %1177 = vmatpush1.msra.mxu0 0.0
        %1178 = vmatprep.subr.mxu0 0.0
        %1179 = vmatpush1.msra.mxu0 0.0
        %1180 = vmatprep.subr.mxu0 0.0
        %1181 = vmatpush1.msra.mxu0 0.0
        %1182 = vmatprep.subr.mxu0 0.0
        %1183 = vmatpush1.msra.mxu0 0.0
        %1184 = vmatprep.subr.mxu0 0.0
        %1185 = vmatpush1.msra.mxu0 0.0
        %1186 = vmatprep.subr.mxu0 0.0
        %1187 = vmatpush1.msra.mxu0 0.0
        %1188 = vmatprep.subr.mxu0 0.0
        %1189 = vmatpush1.msra.mxu0 0.0
        %1190 = vmatprep.subr.mxu0 0.0
        %1191 = vmatpush1.msra.mxu0 0.0
        %1192 = vmatprep.subr.mxu0 0.0
        %1193 = vmatpush1.msra.mxu0 0.0
        %1194 = vmatprep.subr.mxu0 0.0
        %1195 = vmatpush1.msra.mxu0 0.0
        %1196 = vmatprep.subr.mxu0 0.0
        %1197 = vmatpush1.msra.mxu0 0.0
        %1198 = vmatprep.subr.mxu0 0.0
        %1199 = vmatpush1.msra.mxu0 0.0
        %1200 = vmatprep.subr.mxu0 0.0
        %1201 = vmatpush1.msra.mxu0 0.0
        %1202 = vmatprep.subr.mxu0 0.0
        %1203 = vmatpush1.msra.mxu0 0.0
        %1204 = vmatprep.subr.mxu0 0.0
        %1205 = vmatpush1.msra.mxu0 0.0
        %1206 = vmatprep.subr.mxu0 0.0
        %1207 = vmatpush1.msra.mxu0 0.0
        %1208 = vmatprep.subr.mxu0 0.0
        %1209 = vmatpush1.msra.mxu0 0.0
        %1210 = vmatprep.subr.mxu0 0.0
        %1211 = vmatpush1.msra.mxu0 0.0
        %1212 = vmatprep.subr.mxu0 0.0
        %1213 = vmatpush1.msra.mxu0 0.0
        %1214 = vmatprep.mubr.f32.mxu0 0.0
        %1215 = vmatmul.mubr.f32.gmra.mrb[0].mxu0 %v1148
        %v1216 = vpop.f32.mrb[0].mxu0
        %v1217 = vadd.f32 0.0, %v1216
        %v1218 = vpop.f32.mrb[0].mxu0
        %1219 = vdwg.mxu0
        %1220 = vrot.lane.b32.xlu0 %v423, 64
        %v1221 = vpop.permute.xlu0 %1220
        %v1224 = vsel %vm1055, %v1137, 0
        %1226 = vmatprep.subr.mxu0 0.0
        %1227 = vmatpush1.msra.mxu0 %v1221
        %1228 = vmatprep.subr.mxu0 0.0
        %1229 = vmatpush1.msra.mxu0 0.0
        %1230 = vmatprep.subr.mxu0 0.0
        %1231 = vmatpush1.msra.mxu0 0.0
        %1232 = vmatprep.subr.mxu0 0.0
        %1233 = vmatpush1.msra.mxu0 0.0
        %1234 = vmatprep.subr.mxu0 0.0
        %1235 = vmatpush1.msra.mxu0 0.0
        %1236 = vmatprep.subr.mxu0 0.0
        %1237 = vmatpush1.msra.mxu0 0.0
        %1238 = vmatprep.subr.mxu0 0.0
        %1239 = vmatpush1.msra.mxu0 0.0
        %1240 = vmatprep.subr.mxu0 0.0
        %1241 = vmatpush1.msra.mxu0 0.0
        %1242 = vmatprep.subr.mxu0 0.0
        %1243 = vmatpush1.msra.mxu0 0.0
        %1244 = vmatprep.subr.mxu0 0.0
        %1245 = vmatpush1.msra.mxu0 0.0
        %1246 = vmatprep.subr.mxu0 0.0
        %1247 = vmatpush1.msra.mxu0 0.0
        %1248 = vmatprep.subr.mxu0 0.0
        %1249 = vmatpush1.msra.mxu0 0.0
        %1250 = vmatprep.subr.mxu0 0.0
        %1251 = vmatpush1.msra.mxu0 0.0
        %1252 = vmatprep.subr.mxu0 0.0
        %1253 = vmatpush1.msra.mxu0 0.0
        %1254 = vmatprep.subr.mxu0 0.0
        %1255 = vmatpush1.msra.mxu0 0.0
        %1256 = vmatprep.subr.mxu0 0.0
        %1257 = vmatpush1.msra.mxu0 0.0
        %1258 = vmatprep.subr.mxu0 0.0
        %1259 = vmatpush1.msra.mxu0 0.0
        %1260 = vmatprep.subr.mxu0 0.0
        %1261 = vmatpush1.msra.mxu0 0.0
        %1262 = vmatprep.subr.mxu0 0.0
        %1263 = vmatpush1.msra.mxu0 0.0
        %1264 = vmatprep.subr.mxu0 0.0
        %1265 = vmatpush1.msra.mxu0 0.0
        %1266 = vmatprep.subr.mxu0 0.0
        %1267 = vmatpush1.msra.mxu0 0.0
        %1268 = vmatprep.subr.mxu0 0.0
        %1269 = vmatpush1.msra.mxu0 0.0
        %1270 = vmatprep.subr.mxu0 0.0
        %1271 = vmatpush1.msra.mxu0 0.0
        %1272 = vmatprep.subr.mxu0 0.0
        %1273 = vmatpush1.msra.mxu0 0.0
        %1274 = vmatprep.subr.mxu0 0.0
        %1275 = vmatpush1.msra.mxu0 0.0
        %1276 = vmatprep.subr.mxu0 0.0
        %1277 = vmatpush1.msra.mxu0 0.0
        %1278 = vmatprep.subr.mxu0 0.0
        %1279 = vmatpush1.msra.mxu0 0.0
        %1280 = vmatprep.subr.mxu0 0.0
        %1281 = vmatpush1.msra.mxu0 0.0
        %1282 = vmatprep.subr.mxu0 0.0
        %1283 = vmatpush1.msra.mxu0 0.0
        %1284 = vmatprep.subr.mxu0 0.0
        %1285 = vmatpush1.msra.mxu0 0.0
        %1286 = vmatprep.subr.mxu0 0.0
        %1287 = vmatpush1.msra.mxu0 0.0
        %1288 = vmatprep.subr.mxu0 0.0
        %1289 = vmatpush1.msra.mxu0 0.0
        %1290 = vmatprep.mubr.f32.mxu0 0.0
        %1291 = vmatmul.mubr.f32.gmra.mrb[0].mxu0 %v1224
        %v1292 = vpop.f32.mrb[0].mxu0
        %v1293 = vadd.f32 0.0, %v1292
        %v1294 = vpop.f32.mrb[0].mxu0
        %1295 = vdwg.mxu0
        %1296 = vrot.lane.b32.xlu0 %v443, 64
        %v1297 = vpop.permute.xlu0 %1296
        %v1300 = vsel %vm1055, %v1138, 0
        %1302 = vmatprep.subr.mxu0 0.0
        %1303 = vmatpush1.msra.mxu0 %v1297
        %1304 = vmatprep.subr.mxu0 0.0
        %1305 = vmatpush1.msra.mxu0 0.0
        %1306 = vmatprep.subr.mxu0 0.0
        %1307 = vmatpush1.msra.mxu0 0.0
        %1308 = vmatprep.subr.mxu0 0.0
        %1309 = vmatpush1.msra.mxu0 0.0
        %1310 = vmatprep.subr.mxu0 0.0
        %1311 = vmatpush1.msra.mxu0 0.0
        %1312 = vmatprep.subr.mxu0 0.0
        %1313 = vmatpush1.msra.mxu0 0.0
        %1314 = vmatprep.subr.mxu0 0.0
        %1315 = vmatpush1.msra.mxu0 0.0
        %1316 = vmatprep.subr.mxu0 0.0
        %1317 = vmatpush1.msra.mxu0 0.0
        %1318 = vmatprep.subr.mxu0 0.0
        %1319 = vmatpush1.msra.mxu0 0.0
        %1320 = vmatprep.subr.mxu0 0.0
        %1321 = vmatpush1.msra.mxu0 0.0
        %1322 = vmatprep.subr.mxu0 0.0
        %1323 = vmatpush1.msra.mxu0 0.0
        %1324 = vmatprep.subr.mxu0 0.0
        %1325 = vmatpush1.msra.mxu0 0.0
        %1326 = vmatprep.subr.mxu0 0.0
        %1327 = vmatpush1.msra.mxu0 0.0
        %1328 = vmatprep.subr.mxu0 0.0
        %1329 = vmatpush1.msra.mxu0 0.0
        %1330 = vmatprep.subr.mxu0 0.0
        %1331 = vmatpush1.msra.mxu0 0.0
        %1332 = vmatprep.subr.mxu0 0.0
        %1333 = vmatpush1.msra.mxu0 0.0
        %1334 = vmatprep.subr.mxu0 0.0
        %1335 = vmatpush1.msra.mxu0 0.0
        %1336 = vmatprep.subr.mxu0 0.0
        %1337 = vmatpush1.msra.mxu0 0.0
        %1338 = vmatprep.subr.mxu0 0.0
        %1339 = vmatpush1.msra.mxu0 0.0
        %1340 = vmatprep.subr.mxu0 0.0
        %1341 = vmatpush1.msra.mxu0 0.0
        %1342 = vmatprep.subr.mxu0 0.0
        %1343 = vmatpush1.msra.mxu0 0.0
        %1344 = vmatprep.subr.mxu0 0.0
        %1345 = vmatpush1.msra.mxu0 0.0
        %1346 = vmatprep.subr.mxu0 0.0
        %1347 = vmatpush1.msra.mxu0 0.0
        %1348 = vmatprep.subr.mxu0 0.0
        %1349 = vmatpush1.msra.mxu0 0.0
        %1350 = vmatprep.subr.mxu0 0.0
        %1351 = vmatpush1.msra.mxu0 0.0
        %1352 = vmatprep.subr.mxu0 0.0
        %1353 = vmatpush1.msra.mxu0 0.0
        %1354 = vmatprep.subr.mxu0 0.0
        %1355 = vmatpush1.msra.mxu0 0.0
        %1356 = vmatprep.subr.mxu0 0.0
        %1357 = vmatpush1.msra.mxu0 0.0
        %1358 = vmatprep.subr.mxu0 0.0
        %1359 = vmatpush1.msra.mxu0 0.0
        %1360 = vmatprep.subr.mxu0 0.0
        %1361 = vmatpush1.msra.mxu0 0.0
        %1362 = vmatprep.subr.mxu0 0.0
        %1363 = vmatpush1.msra.mxu0 0.0
        %1364 = vmatprep.subr.mxu0 0.0
        %1365 = vmatpush1.msra.mxu0 0.0
        %1366 = vmatprep.mubr.f32.mxu0 0.0
        %1367 = vmatmul.mubr.f32.gmra.mrb[0].mxu0 %v1300
        %v1368 = vpop.f32.mrb[0].mxu0
        %v1369 = vadd.f32 0.0, %v1368
        %v1370 = vpop.f32.mrb[0].mxu0
        %1371 = vdwg.mxu0
        %1372 = vrot.lane.b32.xlu0 %v445, 64
        %v1373 = vpop.permute.xlu0 %1372
        %v1376 = vsel %vm1055, %v1139, 0
        %1378 = vmatprep.subr.mxu0 0.0
        %1379 = vmatpush1.msra.mxu0 %v1373
        %1380 = vmatprep.subr.mxu0 0.0
        %1381 = vmatpush1.msra.mxu0 0.0
        %1382 = vmatprep.subr.mxu0 0.0
        %1383 = vmatpush1.msra.mxu0 0.0
        %1384 = vmatprep.subr.mxu0 0.0
        %1385 = vmatpush1.msra.mxu0 0.0
        %1386 = vmatprep.subr.mxu0 0.0
        %1387 = vmatpush1.msra.mxu0 0.0
        %1388 = vmatprep.subr.mxu0 0.0
        %1389 = vmatpush1.msra.mxu0 0.0
        %1390 = vmatprep.subr.mxu0 0.0
        %1391 = vmatpush1.msra.mxu0 0.0
        %1392 = vmatprep.subr.mxu0 0.0
        %1393 = vmatpush1.msra.mxu0 0.0
        %1394 = vmatprep.subr.mxu0 0.0
        %1395 = vmatpush1.msra.mxu0 0.0
        %1396 = vmatprep.subr.mxu0 0.0
        %1397 = vmatpush1.msra.mxu0 0.0
        %1398 = vmatprep.subr.mxu0 0.0
        %1399 = vmatpush1.msra.mxu0 0.0
        %1400 = vmatprep.subr.mxu0 0.0
        %1401 = vmatpush1.msra.mxu0 0.0
        %1402 = vmatprep.subr.mxu0 0.0
        %1403 = vmatpush1.msra.mxu0 0.0
        %1404 = vmatprep.subr.mxu0 0.0
        %1405 = vmatpush1.msra.mxu0 0.0
        %1406 = vmatprep.subr.mxu0 0.0
        %1407 = vmatpush1.msra.mxu0 0.0
        %1408 = vmatprep.subr.mxu0 0.0
        %1409 = vmatpush1.msra.mxu0 0.0
        %1410 = vmatprep.subr.mxu0 0.0
        %1411 = vmatpush1.msra.mxu0 0.0
        %1412 = vmatprep.subr.mxu0 0.0
        %1413 = vmatpush1.msra.mxu0 0.0
        %1414 = vmatprep.subr.mxu0 0.0
        %1415 = vmatpush1.msra.mxu0 0.0
        %1416 = vmatprep.subr.mxu0 0.0
        %1417 = vmatpush1.msra.mxu0 0.0
        %1418 = vmatprep.subr.mxu0 0.0
        %1419 = vmatpush1.msra.mxu0 0.0
        %1420 = vmatprep.subr.mxu0 0.0
        %1421 = vmatpush1.msra.mxu0 0.0
        %1422 = vmatprep.subr.mxu0 0.0
        %1423 = vmatpush1.msra.mxu0 0.0
        %1424 = vmatprep.subr.mxu0 0.0
        %1425 = vmatpush1.msra.mxu0 0.0
        %1426 = vmatprep.subr.mxu0 0.0
        %1427 = vmatpush1.msra.mxu0 0.0
        %1428 = vmatprep.subr.mxu0 0.0
        %1429 = vmatpush1.msra.mxu0 0.0
        %1430 = vmatprep.subr.mxu0 0.0
        %1431 = vmatpush1.msra.mxu0 0.0
        %1432 = vmatprep.subr.mxu0 0.0
        %1433 = vmatpush1.msra.mxu0 0.0
        %1434 = vmatprep.subr.mxu0 0.0
        %1435 = vmatpush1.msra.mxu0 0.0
        %1436 = vmatprep.subr.mxu0 0.0
        %1437 = vmatpush1.msra.mxu0 0.0
        %1438 = vmatprep.subr.mxu0 0.0
        %1439 = vmatpush1.msra.mxu0 0.0
        %1440 = vmatprep.subr.mxu0 0.0
        %1441 = vmatpush1.msra.mxu0 0.0
        %1442 = vmatprep.mubr.f32.mxu0 0.0
        %1443 = vmatmul.mubr.f32.gmra.mrb[0].mxu0 %v1376
        %v1444 = vpop.f32.mrb[0].mxu0
        %v1445 = vadd.f32 0.0, %v1444
        %v1446 = vpop.f32.mrb[0].mxu0
        %1447 = vdwg.mxu0
        %1448 = vrot.lane.b32.xlu0 %v447, 64
        %v1449 = vpop.permute.xlu0 %1448
        %v1452 = vsel %vm1055, %v1140, 0
        %1454 = vmatprep.subr.mxu0 0.0
        %1455 = vmatpush1.msra.mxu0 %v1449
        %1456 = vmatprep.subr.mxu0 0.0
        %1457 = vmatpush1.msra.mxu0 0.0
        %1458 = vmatprep.subr.mxu0 0.0
        %1459 = vmatpush1.msra.mxu0 0.0
        %1460 = vmatprep.subr.mxu0 0.0
        %1461 = vmatpush1.msra.mxu0 0.0
        %1462 = vmatprep.subr.mxu0 0.0
        %1463 = vmatpush1.msra.mxu0 0.0
        %1464 = vmatprep.subr.mxu0 0.0
        %1465 = vmatpush1.msra.mxu0 0.0
        %1466 = vmatprep.subr.mxu0 0.0
        %1467 = vmatpush1.msra.mxu0 0.0
        %1468 = vmatprep.subr.mxu0 0.0
        %1469 = vmatpush1.msra.mxu0 0.0
        %1470 = vmatprep.subr.mxu0 0.0
        %1471 = vmatpush1.msra.mxu0 0.0
        %1472 = vmatprep.subr.mxu0 0.0
        %1473 = vmatpush1.msra.mxu0 0.0
        %1474 = vmatprep.subr.mxu0 0.0
        %1475 = vmatpush1.msra.mxu0 0.0
        %1476 = vmatprep.subr.mxu0 0.0
        %1477 = vmatpush1.msra.mxu0 0.0
        %1478 = vmatprep.subr.mxu0 0.0
        %1479 = vmatpush1.msra.mxu0 0.0
        %1480 = vmatprep.subr.mxu0 0.0
        %1481 = vmatpush1.msra.mxu0 0.0
        %1482 = vmatprep.subr.mxu0 0.0
        %1483 = vmatpush1.msra.mxu0 0.0
        %1484 = vmatprep.subr.mxu0 0.0
        %1485 = vmatpush1.msra.mxu0 0.0
        %1486 = vmatprep.subr.mxu0 0.0
        %1487 = vmatpush1.msra.mxu0 0.0
        %1488 = vmatprep.subr.mxu0 0.0
        %1489 = vmatpush1.msra.mxu0 0.0
        %1490 = vmatprep.subr.mxu0 0.0
        %1491 = vmatpush1.msra.mxu0 0.0
        %1492 = vmatprep.subr.mxu0 0.0
        %1493 = vmatpush1.msra.mxu0 0.0
        %1494 = vmatprep.subr.mxu0 0.0
        %1495 = vmatpush1.msra.mxu0 0.0
        %1496 = vmatprep.subr.mxu0 0.0
        %1497 = vmatpush1.msra.mxu0 0.0
        %1498 = vmatprep.subr.mxu0 0.0
        %1499 = vmatpush1.msra.mxu0 0.0
        %1500 = vmatprep.subr.mxu0 0.0
        %1501 = vmatpush1.msra.mxu0 0.0
        %1502 = vmatprep.subr.mxu0 0.0
        %1503 = vmatpush1.msra.mxu0 0.0
        %1504 = vmatprep.subr.mxu0 0.0
        %1505 = vmatpush1.msra.mxu0 0.0
        %1506 = vmatprep.subr.mxu0 0.0
        %1507 = vmatpush1.msra.mxu0 0.0
        %1508 = vmatprep.subr.mxu0 0.0
        %1509 = vmatpush1.msra.mxu0 0.0
        %1510 = vmatprep.subr.mxu0 0.0
        %1511 = vmatpush1.msra.mxu0 0.0
        %1512 = vmatprep.subr.mxu0 0.0
        %1513 = vmatpush1.msra.mxu0 0.0
        %1514 = vmatprep.subr.mxu0 0.0
        %1515 = vmatpush1.msra.mxu0 0.0
        %1516 = vmatprep.subr.mxu0 0.0
        %1517 = vmatpush1.msra.mxu0 0.0
        %1518 = vmatprep.mubr.f32.mxu0 0.0
        %1519 = vmatmul.mubr.f32.gmra.mrb[0].mxu0 %v1452
        %v1520 = vpop.f32.mrb[0].mxu0
        %v1521 = vadd.f32 0.0, %v1520
        %v1522 = vpop.f32.mrb[0].mxu0
        %1523 = vdwg.mxu0
        %1524 = vrot.lane.b32.xlu0 %v449, 64
        %v1525 = vpop.permute.xlu0 %1524
        %v1528 = vsel %vm1055, %v1141, 0
        %1530 = vmatprep.subr.mxu0 0.0
        %1531 = vmatpush1.msra.mxu0 %v1525
        %1532 = vmatprep.subr.mxu0 0.0
        %1533 = vmatpush1.msra.mxu0 0.0
        %1534 = vmatprep.subr.mxu0 0.0
        %1535 = vmatpush1.msra.mxu0 0.0
        %1536 = vmatprep.subr.mxu0 0.0
        %1537 = vmatpush1.msra.mxu0 0.0
        %1538 = vmatprep.subr.mxu0 0.0
        %1539 = vmatpush1.msra.mxu0 0.0
        %1540 = vmatprep.subr.mxu0 0.0
        %1541 = vmatpush1.msra.mxu0 0.0
        %1542 = vmatprep.subr.mxu0 0.0
        %1543 = vmatpush1.msra.mxu0 0.0
        %1544 = vmatprep.subr.mxu0 0.0
        %1545 = vmatpush1.msra.mxu0 0.0
        %1546 = vmatprep.subr.mxu0 0.0
        %1547 = vmatpush1.msra.mxu0 0.0
        %1548 = vmatprep.subr.mxu0 0.0
        %1549 = vmatpush1.msra.mxu0 0.0
        %1550 = vmatprep.subr.mxu0 0.0
        %1551 = vmatpush1.msra.mxu0 0.0
        %1552 = vmatprep.subr.mxu0 0.0
        %1553 = vmatpush1.msra.mxu0 0.0
        %1554 = vmatprep.subr.mxu0 0.0
        %1555 = vmatpush1.msra.mxu0 0.0
        %1556 = vmatprep.subr.mxu0 0.0
        %1557 = vmatpush1.msra.mxu0 0.0
        %1558 = vmatprep.subr.mxu0 0.0
        %1559 = vmatpush1.msra.mxu0 0.0
        %1560 = vmatprep.subr.mxu0 0.0
        %1561 = vmatpush1.msra.mxu0 0.0
        %1562 = vmatprep.subr.mxu0 0.0
        %1563 = vmatpush1.msra.mxu0 0.0
        %1564 = vmatprep.subr.mxu0 0.0
        %1565 = vmatpush1.msra.mxu0 0.0
        %1566 = vmatprep.subr.mxu0 0.0
        %1567 = vmatpush1.msra.mxu0 0.0
        %1568 = vmatprep.subr.mxu0 0.0
        %1569 = vmatpush1.msra.mxu0 0.0
        %1570 = vmatprep.subr.mxu0 0.0
        %1571 = vmatpush1.msra.mxu0 0.0
        %1572 = vmatprep.subr.mxu0 0.0
        %1573 = vmatpush1.msra.mxu0 0.0
        %1574 = vmatprep.subr.mxu0 0.0
        %1575 = vmatpush1.msra.mxu0 0.0
        %1576 = vmatprep.subr.mxu0 0.0
        %1577 = vmatpush1.msra.mxu0 0.0
        %1578 = vmatprep.subr.mxu0 0.0
        %1579 = vmatpush1.msra.mxu0 0.0
        %1580 = vmatprep.subr.mxu0 0.0
        %1581 = vmatpush1.msra.mxu0 0.0
        %1582 = vmatprep.subr.mxu0 0.0
        %1583 = vmatpush1.msra.mxu0 0.0
        %1584 = vmatprep.subr.mxu0 0.0
        %1585 = vmatpush1.msra.mxu0 0.0
        %1586 = vmatprep.subr.mxu0 0.0
        %1587 = vmatpush1.msra.mxu0 0.0
        %1588 = vmatprep.subr.mxu0 0.0
        %1589 = vmatpush1.msra.mxu0 0.0
        %1590 = vmatprep.subr.mxu0 0.0
        %1591 = vmatpush1.msra.mxu0 0.0
        %1592 = vmatprep.subr.mxu0 0.0
        %1593 = vmatpush1.msra.mxu0 0.0
        %1594 = vmatprep.mubr.f32.mxu0 0.0
        %1595 = vmatmul.mubr.f32.gmra.mrb[0].mxu0 %v1528
        %v1596 = vpop.f32.mrb[0].mxu0
        %v1597 = vadd.f32 0.0, %v1596
        %v1598 = vpop.f32.mrb[0].mxu0
        %1599 = vdwg.mxu0
        %1600 = vrot.lane.b32.xlu0 %v451, 64
        %v1601 = vpop.permute.xlu0 %1600
        %v1604 = vsel %vm1055, %v1142, 0
        %1606 = vmatprep.subr.mxu0 0.0
        %1607 = vmatpush1.msra.mxu0 %v1601
        %1608 = vmatprep.subr.mxu0 0.0
        %1609 = vmatpush1.msra.mxu0 0.0
        %1610 = vmatprep.subr.mxu0 0.0
        %1611 = vmatpush1.msra.mxu0 0.0
        %1612 = vmatprep.subr.mxu0 0.0
        %1613 = vmatpush1.msra.mxu0 0.0
        %1614 = vmatprep.subr.mxu0 0.0
        %1615 = vmatpush1.msra.mxu0 0.0
        %1616 = vmatprep.subr.mxu0 0.0
        %1617 = vmatpush1.msra.mxu0 0.0
        %1618 = vmatprep.subr.mxu0 0.0
        %1619 = vmatpush1.msra.mxu0 0.0
        %1620 = vmatprep.subr.mxu0 0.0
        %1621 = vmatpush1.msra.mxu0 0.0
        %1622 = vmatprep.subr.mxu0 0.0
        %1623 = vmatpush1.msra.mxu0 0.0
        %1624 = vmatprep.subr.mxu0 0.0
        %1625 = vmatpush1.msra.mxu0 0.0
        %1626 = vmatprep.subr.mxu0 0.0
        %1627 = vmatpush1.msra.mxu0 0.0
        %1628 = vmatprep.subr.mxu0 0.0
        %1629 = vmatpush1.msra.mxu0 0.0
        %1630 = vmatprep.subr.mxu0 0.0
        %1631 = vmatpush1.msra.mxu0 0.0
        %1632 = vmatprep.subr.mxu0 0.0
        %1633 = vmatpush1.msra.mxu0 0.0
        %1634 = vmatprep.subr.mxu0 0.0
        %1635 = vmatpush1.msra.mxu0 0.0
        %1636 = vmatprep.subr.mxu0 0.0
        %1637 = vmatpush1.msra.mxu0 0.0
        %1638 = vmatprep.subr.mxu0 0.0
        %1639 = vmatpush1.msra.mxu0 0.0
        %1640 = vmatprep.subr.mxu0 0.0
        %1641 = vmatpush1.msra.mxu0 0.0
        %1642 = vmatprep.subr.mxu0 0.0
        %1643 = vmatpush1.msra.mxu0 0.0
        %1644 = vmatprep.subr.mxu0 0.0
        %1645 = vmatpush1.msra.mxu0 0.0
        %1646 = vmatprep.subr.mxu0 0.0
        %1647 = vmatpush1.msra.mxu0 0.0
        %1648 = vmatprep.subr.mxu0 0.0
        %1649 = vmatpush1.msra.mxu0 0.0
        %1650 = vmatprep.subr.mxu0 0.0
        %1651 = vmatpush1.msra.mxu0 0.0
        %1652 = vmatprep.subr.mxu0 0.0
        %1653 = vmatpush1.msra.mxu0 0.0
        %1654 = vmatprep.subr.mxu0 0.0
        %1655 = vmatpush1.msra.mxu0 0.0
        %1656 = vmatprep.subr.mxu0 0.0
        %1657 = vmatpush1.msra.mxu0 0.0
        %1658 = vmatprep.subr.mxu0 0.0
        %1659 = vmatpush1.msra.mxu0 0.0
        %1660 = vmatprep.subr.mxu0 0.0
        %1661 = vmatpush1.msra.mxu0 0.0
        %1662 = vmatprep.subr.mxu0 0.0
        %1663 = vmatpush1.msra.mxu0 0.0
        %1664 = vmatprep.subr.mxu0 0.0
        %1665 = vmatpush1.msra.mxu0 0.0
        %1666 = vmatprep.subr.mxu0 0.0
        %1667 = vmatpush1.msra.mxu0 0.0
        %1668 = vmatprep.subr.mxu0 0.0
        %1669 = vmatpush1.msra.mxu0 0.0
        %1670 = vmatprep.mubr.f32.mxu0 0.0
        %1671 = vmatmul.mubr.f32.gmra.mrb[0].mxu0 %v1604
        %v1672 = vpop.f32.mrb[0].mxu0
        %v1673 = vadd.f32 0.0, %v1672
        %v1674 = vpop.f32.mrb[0].mxu0
        %1675 = vdwg.mxu0
        %1676 = vrot.lane.b32.xlu0 %v453, 64
        %v1677 = vpop.permute.xlu0 %1676
        %v1680 = vsel %vm1055, %v1143, 0
        %1682 = vmatprep.subr.mxu0 0.0
        %1683 = vmatpush1.msra.mxu0 %v1677
        %1684 = vmatprep.subr.mxu0 0.0
        %1685 = vmatpush1.msra.mxu0 0.0
        %1686 = vmatprep.subr.mxu0 0.0
        %1687 = vmatpush1.msra.mxu0 0.0
        %1688 = vmatprep.subr.mxu0 0.0
        %1689 = vmatpush1.msra.mxu0 0.0
        %1690 = vmatprep.subr.mxu0 0.0
        %1691 = vmatpush1.msra.mxu0 0.0
        %1692 = vmatprep.subr.mxu0 0.0
        %1693 = vmatpush1.msra.mxu0 0.0
        %1694 = vmatprep.subr.mxu0 0.0
        %1695 = vmatpush1.msra.mxu0 0.0
        %1696 = vmatprep.subr.mxu0 0.0
        %1697 = vmatpush1.msra.mxu0 0.0
        %1698 = vmatprep.subr.mxu0 0.0
        %1699 = vmatpush1.msra.mxu0 0.0
        %1700 = vmatprep.subr.mxu0 0.0
        %1701 = vmatpush1.msra.mxu0 0.0
        %1702 = vmatprep.subr.mxu0 0.0
        %1703 = vmatpush1.msra.mxu0 0.0
        %1704 = vmatprep.subr.mxu0 0.0
        %1705 = vmatpush1.msra.mxu0 0.0
        %1706 = vmatprep.subr.mxu0 0.0
        %1707 = vmatpush1.msra.mxu0 0.0
        %1708 = vmatprep.subr.mxu0 0.0
        %1709 = vmatpush1.msra.mxu0 0.0
        %1710 = vmatprep.subr.mxu0 0.0
        %1711 = vmatpush1.msra.mxu0 0.0
        %1712 = vmatprep.subr.mxu0 0.0
        %1713 = vmatpush1.msra.mxu0 0.0
        %1714 = vmatprep.subr.mxu0 0.0
        %1715 = vmatpush1.msra.mxu0 0.0
        %1716 = vmatprep.subr.mxu0 0.0
        %1717 = vmatpush1.msra.mxu0 0.0
        %1718 = vmatprep.subr.mxu0 0.0
        %1719 = vmatpush1.msra.mxu0 0.0
        %1720 = vmatprep.subr.mxu0 0.0
        %1721 = vmatpush1.msra.mxu0 0.0
        %1722 = vmatprep.subr.mxu0 0.0
        %1723 = vmatpush1.msra.mxu0 0.0
        %1724 = vmatprep.subr.mxu0 0.0
        %1725 = vmatpush1.msra.mxu0 0.0
        %1726 = vmatprep.subr.mxu0 0.0
        %1727 = vmatpush1.msra.mxu0 0.0
        %1728 = vmatprep.subr.mxu0 0.0
        %1729 = vmatpush1.msra.mxu0 0.0
        %1730 = vmatprep.subr.mxu0 0.0
        %1731 = vmatpush1.msra.mxu0 0.0
        %1732 = vmatprep.subr.mxu0 0.0
        %1733 = vmatpush1.msra.mxu0 0.0
        %1734 = vmatprep.subr.mxu0 0.0
        %1735 = vmatpush1.msra.mxu0 0.0
        %1736 = vmatprep.subr.mxu0 0.0
        %1737 = vmatpush1.msra.mxu0 0.0
        %1738 = vmatprep.subr.mxu0 0.0
        %1739 = vmatpush1.msra.mxu0 0.0
        %1740 = vmatprep.subr.mxu0 0.0
        %1741 = vmatpush1.msra.mxu0 0.0
        %1742 = vmatprep.subr.mxu0 0.0
        %1743 = vmatpush1.msra.mxu0 0.0
        %1744 = vmatprep.subr.mxu0 0.0
        %1745 = vmatpush1.msra.mxu0 0.0
        %1746 = vmatprep.mubr.f32.mxu0 0.0
        %1747 = vmatmul.mubr.f32.gmra.mrb[0].mxu0 %v1680
        %v1748 = vpop.f32.mrb[0].mxu0
        %v1749 = vadd.f32 0.0, %v1748
        %v1750 = vpop.f32.mrb[0].mxu0
        %1751 = vdwg.mxu0
        %1754 = vrot.lane.b32.xlu0 %v1369, 16
        %v1755 = vpop.permute.xlu0 %1754
        %1756 = vrot.lane.b32.xlu0 %v1445, 16
        %v1757 = vpop.permute.xlu0 %1756
        %1762 = vrot.lane.b32.xlu0 %v1521, 32
        %v1763 = vpop.permute.xlu0 %1762
        %1764 = vrot.lane.b32.xlu0 %v1597, 32
        %v1765 = vpop.permute.xlu0 %1764
        %1770 = vrot.lane.b32.xlu0 %v1673, 48
        %v1771 = vpop.permute.xlu0 %1770
        %1772 = vrot.lane.b32.xlu0 %v1749, 48
        %v1773 = vpop.permute.xlu0 %1772
        %v1776 = vsel %vm454, %v1217, %v1755
        %v1777 = vsel %vm454, %v1293, %v1757
        %v1778 = vsel %vm314, %v1776, %v1763
        %v1779 = vsel %vm314, %v1777, %v1765
        %vm1780 = vcmask 392192
        %v1781 = vsel %vm1780, %v1778, %v1771
        %v1782 = vsel %vm1780, %v1779, %v1773
        %v1783 = vpack.c.bf16 %v1782, %v1781
        %v1784 = vld [vmem:[%s4] sm:$0xf]
        %v1785 = vld [vmem:[%s4 + $0x4] sm:$0xf]
        %v1786 = vld [vmem:[%s4 + $0x8] sm:$0xf]
        %v1787 = vld [vmem:[%s4 + $0xc] sm:$0xf]
        %v1788 = vld [vmem:[%s4 + $0x10] sm:$0xf]
        %v1789 = vld [vmem:[%s4 + $0x14] sm:$0xf]
        %v1790 = vld [vmem:[%s4 + $0x18] sm:$0xf]
        %v1791 = vld [vmem:[%s4 + $0x1c] sm:$0xf]
        %v1792 = vld [vmem:[%s5] sm:$0x1]
        %v1794 = vlaneseq
        %v1795 = vshrl.u32 %v1794, 7
        %v1796 = vsub.s32 0, %v1795
        %v1797 = vrot.slane %v1792, %v1796
        %v1807 = vunpack.c.l.b16 %v1784
        %v1808 = vunpack.c.l.b16 %v1785
        %v1809 = vunpack.c.l.b16 %v1786
        %v1810 = vunpack.c.l.b16 %v1787
        %v1811 = vunpack.c.l.b16 %v1788
        %v1812 = vunpack.c.l.b16 %v1789
        %v1813 = vunpack.c.l.b16 %v1790
        %v1814 = vunpack.c.l.b16 %v1791
        %v1815 = vpack.c.b16 %v1808, %v1807
        %v1816 = vpack.c.b16 %v1810, %v1809
        %v1817 = vpack.c.b16 %v1812, %v1811
        %v1818 = vpack.c.b16 %v1814, %v1813
        %vm1823 = vcmask 523264
        %v1825 = vsel %vm1823, %v1783, 0
        %1827 = vmatprep.subr.bf16.mxu0 0
        %1828 = vmatpush1.bf16.msra.mxu0 %v1815
        %1829 = vmatprep.subr.bf16.mxu0 0
        %1830 = vmatpush1.bf16.msra.mxu0 %v1816
        %1831 = vmatprep.subr.bf16.mxu0 0
        %1832 = vmatpush1.bf16.msra.mxu0 %v1817
        %1833 = vmatprep.subr.bf16.mxu0 0
        %1834 = vmatpush1.bf16.msra.mxu0 %v1818
        %1835 = vmatprep.subr.bf16.mxu0 0
        %1836 = vmatpush1.bf16.msra.mxu0 0
        %1837 = vmatprep.subr.bf16.mxu0 0
        %1838 = vmatpush1.bf16.msra.mxu0 0
        %1839 = vmatprep.subr.bf16.mxu0 0
        %1840 = vmatpush1.bf16.msra.mxu0 0
        %1841 = vmatprep.subr.bf16.mxu0 0
        %1842 = vmatpush1.bf16.msra.mxu0 0
        %1843 = vmatprep.subr.bf16.mxu0 0
        %1844 = vmatpush1.bf16.msra.mxu0 0
        %1845 = vmatprep.subr.bf16.mxu0 0
        %1846 = vmatpush1.bf16.msra.mxu0 0
        %1847 = vmatprep.subr.bf16.mxu0 0
        %1848 = vmatpush1.bf16.msra.mxu0 0
        %1849 = vmatprep.subr.bf16.mxu0 0
        %1850 = vmatpush1.bf16.msra.mxu0 0
        %1851 = vmatprep.subr.bf16.mxu0 0
        %1852 = vmatpush1.bf16.msra.mxu0 0
        %1853 = vmatprep.subr.bf16.mxu0 0
        %1854 = vmatpush1.bf16.msra.mxu0 0
        %1855 = vmatprep.subr.bf16.mxu0 0
        %1856 = vmatpush1.bf16.msra.mxu0 0
        %1857 = vmatprep.subr.bf16.mxu0 0
        %1858 = vmatpush1.bf16.msra.mxu0 0
        %1859 = vmatprep.mubr.bf16.mxu0 0
        %1860 = vmatmul.mubr.bf16.gmra.mrb[0].mxu0 %v1825
        %v1861 = vpop.f32.mrb[0].mxu0
        %v1862 = vadd.f32 %v1797, %v1861
        %v1863 = vpop.f32.mrb[0].mxu0
        %v1864 = vpop.f32.mrb[0].mxu0
        %v1865 = vadd.f32 %v1797, %v1864
        %v1866 = vpop.f32.mrb[0].mxu0
        %1867 = vdwg.mxu0
        %1868 = vst.msk [vmem:[%s276] sm:$0xff] %vm314, %v1862
        %1869 = vst.msk [vmem:[%s276 + $0x8] sm:$0xff] %vm314, %v1865
        %s1870 = sand.u32 %s165, 1
        %s1871 = scalar_lea.sflag [#allocation4], %s1870
        %s1872 = sand.u32 %s165, 1
        %s1873 = smul.addr %s1872, 16
        %s1874 = scalar_lea.vmem [#allocation5], %s1873
        // Predicated region
        $region49: #{tpu_custom_call.1} parent=43 // pred_check
          %p1875 = pneg %p175
        $region50: #{tpu_custom_call.1} parent=43 // pred_check_branch
          %1877 = sbr.rel (%p1875) target = $region52
        $region51: #{tpu_custom_call.1} parent=43 // pred_region
          %s1878 = smul.u32 2, %s21
          %s1880 = ssub.s32 256, 256
          %1881 = vsyncadd %s1871, %s1880
          %s1882 = smul.addr %s1878, 128
          %s1883 = scalar_lea.hbm %s6, %s1882
          %s1884 = sshll.u32 %s1874, 4
          %s1885 = int_to_ptr.vmem [resolvable:$true] %s1884
          %1890 = dma.vmem_to_hbm [thread:$0]  %s1885, 256, %s1883, %s1871, 128, 128, 8
        $region52: #{tpu_custom_call.1} parent=43 // pred_fallthru
          _
      $region44: #{tpu_custom_call.1} parent=5 // pred_fallthru
        _
      %p1891 = scmp.le.s32.totalorder 2, %s16
      // Predicated region
      $region53: #{tpu_custom_call.1} parent=5 // pred_check
        %p1892 = pneg %p1891
      $region54: #{tpu_custom_call.1} parent=5 // pred_check_branch
        %1894 = sbr.rel (%p1892) target = $region56
      $region55: #{tpu_custom_call.1} parent=5 // pred_region
        %s1895 = ssub.s32 %s16, 2
        // Predicated region
        $region57: #{tpu_custom_call.1} parent=55 // pred_check
          %p1896 = pneg %p181
        $region58: #{tpu_custom_call.1} parent=55 // pred_check_branch
          %1898 = sbr.rel (%p1896) target = $region60
        $region59: #{tpu_custom_call.1} parent=55 // pred_region
          %s1899 = sand.u32 %s166, 1
          %s1900 = scalar_lea.sflag [#allocation4], %s1899
          %s1901 = sand.u32 %s166, 1
          %s1902 = smul.addr %s1901, 16
          %s1903 = scalar_lea.vmem [#allocation5], %s1902
          %1904 = dma.done %s1900, 256
        $region60: #{tpu_custom_call.1} parent=55 // pred_fallthru
          _
      $region56: #{tpu_custom_call.1} parent=5 // pred_fallthru
        _
    $region6: #{tpu_custom_call.1} parent=1 // loop_footer
      %s20 = sadd.s32 1, %s16
    $region7: #{tpu_custom_call.1} parent=1 // loop_footer_branch
      %15 = sbr.rel target = $region3
    $region8: #{tpu_custom_call.1} parent=1 // loop_exit
      _
    %1905 = vsyncpa [#allocation3], 1
    %s1906 = scalar_lea.sflag [#allocation3], 1
    %1907 = vsyncpa %s1906, 1
    %1908 = vsyncpa [#allocation4], 1
    %s1909 = scalar_lea.sflag [#allocation4], 1
    %1910 = vsyncpa %s1909, 1

</llo_original>
